<compile_context>
chip_gen: v5e
topology: v5e:2x2
jax: 0.10.0
libtpu: 0.0.40
codegen_flags: <defaults>
</compile_context>

<pallas_src>
import functools

import jax
import jax.numpy as jnp
from jax.experimental import pallas as pl
from jax.experimental.pallas import tpu as pltpu

IN_FEATURES = 2048     # fc1 input size (after the [:, 2560:] slice)
SLICE_OFFSET = 2560    # features dropped at the front of the raw input
RAW_FEATURES = SLICE_OFFSET + IN_FEATURES   # 4608
LN_EPS = 1e-5          # torch.nn.LayerNorm default eps

K_BLOCK = 512                                  # gcd(2560, 2048) = 512
NUM_K_BLOCKS = IN_FEATURES // K_BLOCK          # 4
K_BLOCK_OFFSET = SLICE_OFFSET // K_BLOCK       # 5
assert SLICE_OFFSET % K_BLOCK == 0 and IN_FEATURES % K_BLOCK == 0


def _round_up(x, m):
    return (x + m - 1) // m * m


def _layernorm(h, gamma, beta):
    # One-pass statistics: mu = E[h], var = E[h^2] - mu^2 (single elementwise
    # sweep over the (tb, H) tile; XLU does the two lane reductions).
    inv_n = 1.0 / h.shape[-1]
    s = jnp.sum(h, axis=-1, keepdims=True)
    s2 = jnp.sum(h * h, axis=-1, keepdims=True)
    mu = s * inv_n
    var = s2 * inv_n - mu * mu
    return (h - mu) * jax.lax.rsqrt(var + LN_EPS) * gamma + beta


def layernormnet_kernel(x_ref, w1_ref, w2_ref, w3_ref, c_ref, b3_ref,
                        o_ref, acc_ref):
    # Grid: (batch tiles [parallel], fc1 K blocks [arbitrary]).
    # x_ref : (tb, 512) f32 block of the RAW input; the [:, 2560:] slice is
    #         expressed purely by the BlockSpec index_map (block 5 + k).
    # w1_ref: (512, H) bf16 K-block of fc1 weights.
    # w2/w3 : bf16 weights, full blocks, constant index (VMEM-resident).
    # c_ref : (8, H) f32 packed rows [b1, g1, bb1, b2, g2, bb2, 0, 0].
    # b3_ref: (1, O) f32.
    # acc_ref: (tb, H) f32 VMEM scratch — fc1 accumulator across K blocks.
    k = pl.program_id(1)

    @pl.when(k == 0)
    def _():
        acc_ref[...] = jnp.zeros_like(acc_ref)

    # fc1 partial product: cast this f32 feature block to bf16 in vregs and
    # run the MXU matmul with f32 accumulation.
    acc_ref[...] += jnp.dot(x_ref[...].astype(jnp.bfloat16), w1_ref[...],
                            preferred_element_type=jnp.float32)

    @pl.when(k == pl.num_programs(1) - 1)
    def _():
        c = c_ref[...]
        b1, g1, bb1 = c[0:1, :], c[1:2, :], c[2:3, :]
        b2, g2, bb2 = c[3:4, :], c[4:5, :], c[5:6, :]

        # fc1 bias -> ln1 -> (dropout = identity, eval) -> relu
        h = _layernorm(acc_ref[...] + b1, g1, bb1)
        h = jnp.maximum(h, 0.0)

        # fc2 -> ln2 -> (dropout = identity, eval) -> relu
        h = jnp.dot(h.astype(jnp.bfloat16), w2_ref[...],
                    preferred_element_type=jnp.float32) + b2
        h = _layernorm(h, g2, bb2)
        h = jnp.maximum(h, 0.0)

        # fc3
        out = jnp.dot(h.astype(jnp.bfloat16), w3_ref[...],
                      preferred_element_type=jnp.float32) + b3_ref[...]
        o_ref[...] = out.astype(o_ref.dtype)


@functools.partial(jax.jit, static_argnames=("tb",))
def layernormnet_forward(x_raw, params, tb=128):
    """x_raw: [B, 4608] float32 (raw features). Returns [B, out_dim] float32."""
    assert x_raw.shape[1] == RAW_FEATURES, "expected 4608 raw features"
    w1, b1, g1, bb1, w2, b2, g2, bb2, w3, b3 = params
    H = w1.shape[1]
    O = w3.shape[1]
    bf16 = jnp.bfloat16

    B = x_raw.shape[0]
    # Batch tile: at most `tb`, but small enough that B > 16 yields >= 2
    # "parallel" grid steps (keeps both v7x TensorCores busy); 16-row aligned
    # for dense bf16 sublane packing of the intermediates, and never (much)
    # larger than the batch itself.  No jnp.pad: pl.cdiv + Pallas partial-block
    # masking handles ragged batches without an extra HBM pass.
    tb_eff = max(8, min(tb, _round_up(pl.cdiv(B, 2), 16), _round_up(B, 8)))
    nb = pl.cdiv(B, tb_eff)
    grid = (nb, NUM_K_BLOCKS)

    # bf16 weights for the MXU; bias / LayerNorm params stay f32 (f32 tail math).
    w1b, w2b, w3b = w1.astype(bf16), w2.astype(bf16), w3.astype(bf16)

    # Pack the six (H,) vectors into a single (8, H) f32 constant (one stream,
    # sublane-aligned) instead of six separate 1-row inputs.
    zero_h = jnp.zeros((H,), jnp.float32)
    consts = jnp.stack(
        [b1, g1, bb1, b2, g2, bb2, zero_h, zero_h], axis=0).astype(jnp.float32)
    b3_2d = b3.reshape(1, O).astype(jnp.float32)

    full = lambda r, c_: pl.BlockSpec((r, c_), lambda i, k: (0, 0))

    flops = 2 * B * (IN_FEATURES * H + H * H + H * O)
    transcendentals = 2 * B  # one rsqrt per row per LayerNorm
    bytes_accessed = (
        B * IN_FEATURES * 4                          # x slice streamed as f32
        + (IN_FEATURES * H + H * H + H * O) * 2      # weights (bf16)
        + (8 * H + O) * 4                            # packed consts + b3 (f32)
        + B * O * 4)                                 # output (f32)
    cost = pl.CostEstimate(flops=int(flops),
                           transcendentals=int(transcendentals),
                           bytes_accessed=int(bytes_accessed))

    out = pl.pallas_call(
        layernormnet_kernel,
        out_shape=jax.ShapeDtypeStruct((B, O), jnp.float32),
        grid_spec=pltpu.PrefetchScalarGridSpec(
            num_scalar_prefetch=0,
            grid=grid,
            in_specs=[
                # Raw input: the [:, 2560:] slice is block 5..8 along features.
                pl.BlockSpec((tb_eff, K_BLOCK),
                             lambda i, k: (i, K_BLOCK_OFFSET + k)),
                # fc1 weights, K-tiled to match the x feature blocks.
                pl.BlockSpec((K_BLOCK, H), lambda i, k: (k, 0)),
                full(H, H),             # w2  (constant index -> VMEM resident)
                full(H, O),             # w3
                full(8, H),             # packed b1,g1,bb1,b2,g2,bb2
                full(1, O),             # b3
            ],
            out_specs=pl.BlockSpec((tb_eff, O), lambda i, k: (i, 0)),
            scratch_shapes=[pltpu.VMEM((tb_eff, H), jnp.float32)],
        ),
        compiler_params=pltpu.CompilerParams(
            # batch tiles are independent; K axis carries the fc1 accumulator.
            dimension_semantics=("parallel", "arbitrary"),
            # No vmem_limit override: kernel needs ~2-3 MiB, default scoped
            # limit is plenty and leaves headroom on v7x (64 MiB physical).
        ),
        cost_estimate=cost,
    )(x_raw, w1b, w2b, w3b, consts, b3_2d)

    return out[:B]


def init_params(key, hidden_dim, out_dim, dtype=jnp.float32):
    """Deterministic synthetic parameters (shapes match nn.Linear / nn.LayerNorm)."""
    ks = jax.random.split(key, 6)
    scale1 = 1.0 / jnp.sqrt(IN_FEATURES)
    scale2 = 1.0 / jnp.sqrt(hidden_dim)
    w1 = jax.random.uniform(ks[0], (IN_FEATURES, hidden_dim), dtype, -scale1, scale1)
    b1 = jax.random.uniform(ks[1], (hidden_dim,), dtype, -scale1, scale1)
    w2 = jax.random.uniform(ks[2], (hidden_dim, hidden_dim), dtype, -scale2, scale2)
    b2 = jax.random.uniform(ks[3], (hidden_dim,), dtype, -scale2, scale2)
    w3 = jax.random.uniform(ks[4], (hidden_dim, out_dim), dtype, -scale2, scale2)
    b3 = jax.random.uniform(ks[5], (out_dim,), dtype, -scale2, scale2)
    g1 = jnp.ones((hidden_dim,), dtype)
    bb1 = jnp.zeros((hidden_dim,), dtype)
    g2 = jnp.ones((hidden_dim,), dtype)
    bb2 = jnp.zeros((hidden_dim,), dtype)
    return (w1, b1, g1, bb1, w2, b2, g2, bb2, w3, b3)


def reference_forward(x_raw, params):
    """Pure-JAX reference with the same bf16-operand / f32-accumulate matmuls
    and f32 LayerNorm tail as the kernel (eval-mode dropout)."""
    w1, b1, g1, bb1, w2, b2, g2, bb2, w3, b3 = params
    bf16 = jnp.bfloat16
    x = x_raw[:, SLICE_OFFSET:SLICE_OFFSET + IN_FEATURES].astype(bf16)

    def ln(h, g, b):
        mu = jnp.mean(h, axis=-1, keepdims=True)
        var = jnp.mean((h - mu) ** 2, axis=-1, keepdims=True)
        return (h - mu) / jnp.sqrt(var + LN_EPS) * g + b

    h = jnp.dot(x, w1.astype(bf16), preferred_element_type=jnp.float32) + b1
    h = jnp.maximum(ln(h, g1, bb1), 0.0)
    h = jnp.dot(h.astype(bf16), w2.astype(bf16),
                preferred_element_type=jnp.float32) + b2
    h = jnp.maximum(ln(h, g2, bb2), 0.0)
    return jnp.dot(h.astype(bf16), w3.astype(bf16),
                   preferred_element_type=jnp.float32) + b3


if __name__ == "__main__":
    B = 256        # -> 2 "parallel" batch tiles of 128 rows (both v7x cores)
    HIDDEN = 128
    OUT = 128
    key = jax.random.PRNGKey(0)
    kx, kp = jax.random.split(key)

    # Raw input has 2560 + 2048 features; the kernel slices off the first 2560
    # via its BlockSpec index_map.
    x_raw = jax.random.normal(kx, (B, RAW_FEATURES), jnp.float32)
    params = init_params(kp, HIDDEN, OUT)

    out = layernormnet_forward(x_raw, params)
    out = jax.block_until_ready(out)

    ref = reference_forward(x_raw, params)
    assert out.shape == (B, OUT)
    max_err = float(jnp.max(jnp.abs(out - ref)))
    assert jnp.allclose(out, ref, atol=1e-2, rtol=1e-2), (
        f"mismatch vs JAX reference (max abs err {max_err})")

    print("KERNEL_OK")
</pallas_src>

<mosaic_0001>
module attributes {stable_mosaic.version = 11 : i64} {
  func.func @layernormnet_kernel(%arg0: i32, %arg1: i32, %arg2: memref<128x512xf32, #tpu.memory_space<vmem>>, %arg3: memref<512x128xbf16, #tpu.memory_space<vmem>>, %arg4: memref<128x128xbf16, #tpu.memory_space<vmem>>, %arg5: memref<128x128xbf16, #tpu.memory_space<vmem>>, %arg6: memref<8x128xf32, #tpu.memory_space<vmem>>, %arg7: memref<1x128xf32, #tpu.memory_space<vmem>>, %arg8: memref<128x128xf32, #tpu.memory_space<vmem>>, %arg9: memref<128x128xf32, #tpu.memory_space<vmem>>) attributes {dimension_semantics = [#tpu.dimension_semantics<parallel>, #tpu.dimension_semantics<arbitrary>], iteration_bounds = array<i64: 2, 4>, scalar_prefetch = 0 : i64, scratch_operands = 1 : i64, tpu.core_type = #tpu.core_type<tc>, window_params = [{transform_indices = @transform_0, window_bounds = array<i64: 128, 512>}, {transform_indices = @transform_1, window_bounds = array<i64: 512, 128>}, {pipeline_mode = #tpu.pipeline_mode<synchronous>, transform_indices = @transform_2, window_bounds = array<i64: 128, 128>}, {pipeline_mode = #tpu.pipeline_mode<synchronous>, transform_indices = @transform_3, window_bounds = array<i64: 128, 128>}, {pipeline_mode = #tpu.pipeline_mode<synchronous>, transform_indices = @transform_4, window_bounds = array<i64: 8, 128>}, {pipeline_mode = #tpu.pipeline_mode<synchronous>, transform_indices = @transform_5, window_bounds = array<i64: 1, 128>}, {transform_indices = @transform_6, window_bounds = array<i64: 128, 128>}]} {
    %c0_i32 = arith.constant 0 : i32
    %0 = arith.cmpi eq, %arg1, %c0_i32 : i32
    %1 = arith.extui %0 : i1 to i32
    %c0_i32_0 = arith.constant 0 : i32
    %2 = arith.cmpi ne, %1, %c0_i32_0 : i32
    scf.if %2 {
      %cst_9 = arith.constant 0.000000e+00 : f32
      %13 = vector.broadcast %cst_9 : f32 to vector<128x128xf32>
      %c0_10 = arith.constant 0 : index
      %c0_11 = arith.constant 0 : index
      %14 = vector.load %arg9[%c0_10, %c0_11] : memref<128x128xf32, #tpu.memory_space<vmem>>, vector<128x128xf32>
      tpu.vector_store %arg9[%c0_10, %c0_11], %13 {strides = array<i32>} : memref<128x128xf32, #tpu.memory_space<vmem>>, vector<128x128xf32>,
    } else {
    }
    %c0 = arith.constant 0 : index
    %c0_1 = arith.constant 0 : index
    %3 = vector.load %arg9[%c0, %c0_1] : memref<128x128xf32, #tpu.memory_space<vmem>>, vector<128x128xf32>
    %c0_2 = arith.constant 0 : index
    %c0_3 = arith.constant 0 : index
    %4 = vector.load %arg2[%c0_2, %c0_3] : memref<128x512xf32, #tpu.memory_space<vmem>>, vector<128x512xf32>
    %5 = arith.truncf %4 : vector<128x512xf32> to vector<128x512xbf16>
    %c0_4 = arith.constant 0 : index
    %c0_5 = arith.constant 0 : index
    %6 = vector.load %arg3[%c0_4, %c0_5] : memref<512x128xbf16, #tpu.memory_space<vmem>>, vector<512x128xbf16>
    %cst = arith.constant dense<0.000000e+00> : vector<128x128xf32>
    %7 = tpu.matmul %5, %6, %cst {dimension_numbers = #tpu.dot_dimension_numbers<[1], [0], [0], [1], [0, 0, 1, 1], [], []>} : vector<128x512xbf16>, vector<512x128xbf16>, vector<128x128xf32> -> vector<128x128xf32>
    %8 = arith.addf %3, %7 : vector<128x128xf32>
    %c0_6 = arith.constant 0 : index
    %c0_7 = arith.constant 0 : index
    %9 = vector.load %arg9[%c0_6, %c0_7] : memref<128x128xf32, #tpu.memory_space<vmem>>, vector<128x128xf32>
    tpu.vector_store %arg9[%c0_6, %c0_7], %8 {strides = array<i32>} : memref<128x128xf32, #tpu.memory_space<vmem>>, vector<128x128xf32>,
    %c3_i32 = arith.constant 3 : i32
    %10 = arith.cmpi eq, %arg1, %c3_i32 : i32
    %11 = arith.extui %10 : i1 to i32
    %c0_i32_8 = arith.constant 0 : i32
    %12 = arith.cmpi ne, %11, %c0_i32_8 : i32
    scf.if %12 {
      %c0_9 = arith.constant 0 : index
      %c0_10 = arith.constant 0 : index
      %13 = vector.load %arg6[%c0_9, %c0_10] : memref<8x128xf32, #tpu.memory_space<vmem>>, vector<8x128xf32>
      %14 = vector.extract_strided_slice %13 {offsets = [0, 0], sizes = [1, 128], strides = [1, 1]} : vector<8x128xf32> to vector<1x128xf32>
      %15 = vector.extract_strided_slice %13 {offsets = [1, 0], sizes = [1, 128], strides = [1, 1]} : vector<8x128xf32> to vector<1x128xf32>
      %16 = vector.extract_strided_slice %13 {offsets = [2, 0], sizes = [1, 128], strides = [1, 1]} : vector<8x128xf32> to vector<1x128xf32>
      %17 = vector.extract_strided_slice %13 {offsets = [3, 0], sizes = [1, 128], strides = [1, 1]} : vector<8x128xf32> to vector<1x128xf32>
      %18 = vector.extract_strided_slice %13 {offsets = [4, 0], sizes = [1, 128], strides = [1, 1]} : vector<8x128xf32> to vector<1x128xf32>
      %19 = vector.extract_strided_slice %13 {offsets = [5, 0], sizes = [1, 128], strides = [1, 1]} : vector<8x128xf32> to vector<1x128xf32>
      %c0_11 = arith.constant 0 : index
      %c0_12 = arith.constant 0 : index
      %20 = vector.load %arg9[%c0_11, %c0_12] : memref<128x128xf32, #tpu.memory_space<vmem>>, vector<128x128xf32>
      %21 = vector.broadcast %14 : vector<1x128xf32> to vector<128x128xf32>
      %22 = arith.addf %20, %21 : vector<128x128xf32>
      %cst_13 = arith.constant dense<0.000000e+00> : vector<128xf32>
      %23 = vector.multi_reduction <add>, %22, %cst_13 [1] : vector<128x128xf32> to vector<128xf32>
      %24 = vector.shape_cast %23 : vector<128xf32> to vector<128x1xf32>
      %25 = arith.mulf %22, %22 : vector<128x128xf32>
      %cst_14 = arith.constant dense<0.000000e+00> : vector<128xf32>
      %26 = vector.multi_reduction <add>, %25, %cst_14 [1] : vector<128x128xf32> to vector<128xf32>
      %27 = vector.shape_cast %26 : vector<128xf32> to vector<128x1xf32>
      %cst_15 = arith.constant 7.812500e-03 : f32
      %28 = vector.broadcast %cst_15 : f32 to vector<128x1xf32>
      %29 = arith.mulf %24, %28 : vector<128x1xf32>
      %cst_16 = arith.constant 7.812500e-03 : f32
      %30 = vector.broadcast %cst_16 : f32 to vector<128x1xf32>
      %31 = arith.mulf %27, %30 : vector<128x1xf32>
      %32 = arith.mulf %29, %29 : vector<128x1xf32>
      %33 = arith.subf %31, %32 : vector<128x1xf32>
      %34 = vector.broadcast %29 : vector<128x1xf32> to vector<128x128xf32>
      %35 = arith.subf %22, %34 : vector<128x128xf32>
      %cst_17 = arith.constant 9.99999974E-6 : f32
      %36 = vector.broadcast %cst_17 : f32 to vector<128x1xf32>
      %37 = arith.addf %33, %36 : vector<128x1xf32>
      %38 = math.rsqrt %37 : vector<128x1xf32>
      %39 = vector.broadcast %38 : vector<128x1xf32> to vector<128x128xf32>
      %40 = arith.mulf %35, %39 : vector<128x128xf32>
      %41 = vector.broadcast %15 : vector<1x128xf32> to vector<128x128xf32>
      %42 = arith.mulf %40, %41 : vector<128x128xf32>
      %43 = vector.broadcast %16 : vector<1x128xf32> to vector<128x128xf32>
      %44 = arith.addf %42, %43 : vector<128x128xf32>
      %cst_18 = arith.constant 0.000000e+00 : f32
      %45 = vector.broadcast %cst_18 : f32 to vector<128x128xf32>
      %46 = arith.maximumf %44, %45 : vector<128x128xf32>
      %47 = arith.truncf %46 : vector<128x128xf32> to vector<128x128xbf16>
      %c0_19 = arith.constant 0 : index
      %c0_20 = arith.constant 0 : index
      %48 = vector.load %arg4[%c0_19, %c0_20] : memref<128x128xbf16, #tpu.memory_space<vmem>>, vector<128x128xbf16>
      %cst_21 = arith.constant dense<0.000000e+00> : vector<128x128xf32>
      %49 = tpu.matmul %47, %48, %cst_21 {dimension_numbers = #tpu.dot_dimension_numbers<[1], [0], [0], [1], [0, 0, 1, 1], [], []>} : vector<128x128xbf16>, vector<128x128xbf16>, vector<128x128xf32> -> vector<128x128xf32>
      %50 = vector.broadcast %17 : vector<1x128xf32> to vector<128x128xf32>
      %51 = arith.addf %49, %50 : vector<128x128xf32>
      %cst_22 = arith.constant dense<0.000000e+00> : vector<128xf32>
      %52 = vector.multi_reduction <add>, %51, %cst_22 [1] : vector<128x128xf32> to vector<128xf32>
      %53 = vector.shape_cast %52 : vector<128xf32> to vector<128x1xf32>
      %54 = arith.mulf %51, %51 : vector<128x128xf32>
      %cst_23 = arith.constant dense<0.000000e+00> : vector<128xf32>
      %55 = vector.multi_reduction <add>, %54, %cst_23 [1] : vector<128x128xf32> to vector<128xf32>
      %56 = vector.shape_cast %55 : vector<128xf32> to vector<128x1xf32>
      %cst_24 = arith.constant 7.812500e-03 : f32
      %57 = vector.broadcast %cst_24 : f32 to vector<128x1xf32>
      %58 = arith.mulf %53, %57 : vector<128x1xf32>
      %cst_25 = arith.constant 7.812500e-03 : f32
      %59 = vector.broadcast %cst_25 : f32 to vector<128x1xf32>
      %60 = arith.mulf %56, %59 : vector<128x1xf32>
      %61 = arith.mulf %58, %58 : vector<128x1xf32>
      %62 = arith.subf %60, %61 : vector<128x1xf32>
      %63 = vector.broadcast %58 : vector<128x1xf32> to vector<128x128xf32>
      %64 = arith.subf %51, %63 : vector<128x128xf32>
      %cst_26 = arith.constant 9.99999974E-6 : f32
      %65 = vector.broadcast %cst_26 : f32 to vector<128x1xf32>
      %66 = arith.addf %62, %65 : vector<128x1xf32>
      %67 = math.rsqrt %66 : vector<128x1xf32>
      %68 = vector.broadcast %67 : vector<128x1xf32> to vector<128x128xf32>
      %69 = arith.mulf %64, %68 : vector<128x128xf32>
      %70 = vector.broadcast %18 : vector<1x128xf32> to vector<128x128xf32>
      %71 = arith.mulf %69, %70 : vector<128x128xf32>
      %72 = vector.broadcast %19 : vector<1x128xf32> to vector<128x128xf32>
      %73 = arith.addf %71, %72 : vector<128x128xf32>
      %cst_27 = arith.constant 0.000000e+00 : f32
      %74 = vector.broadcast %cst_27 : f32 to vector<128x128xf32>
      %75 = arith.maximumf %73, %74 : vector<128x128xf32>
      %76 = arith.truncf %75 : vector<128x128xf32> to vector<128x128xbf16>
      %c0_28 = arith.constant 0 : index
      %c0_29 = arith.constant 0 : index
      %77 = vector.load %arg5[%c0_28, %c0_29] : memref<128x128xbf16, #tpu.memory_space<vmem>>, vector<128x128xbf16>
      %cst_30 = arith.constant dense<0.000000e+00> : vector<128x128xf32>
      %78 = tpu.matmul %76, %77, %cst_30 {dimension_numbers = #tpu.dot_dimension_numbers<[1], [0], [0], [1], [0, 0, 1, 1], [], []>} : vector<128x128xbf16>, vector<128x128xbf16>, vector<128x128xf32> -> vector<128x128xf32>
      %c0_31 = arith.constant 0 : index
      %c0_32 = arith.constant 0 : index
      %79 = vector.load %arg7[%c0_31, %c0_32] : memref<1x128xf32, #tpu.memory_space<vmem>>, vector<1x128xf32>
      %80 = vector.broadcast %79 : vector<1x128xf32> to vector<128x128xf32>
      %81 = arith.addf %78, %80 : vector<128x128xf32>
      %c0_33 = arith.constant 0 : index
      %c0_34 = arith.constant 0 : index
      %82 = vector.load %arg8[%c0_33, %c0_34] : memref<128x128xf32, #tpu.memory_space<vmem>>, vector<128x128xf32>
      tpu.vector_store %arg8[%c0_33, %c0_34], %81 {strides = array<i32>} : memref<128x128xf32, #tpu.memory_space<vmem>>, vector<128x128xf32>,
    } else {
    }
    return
  }
  func.func @transform_0(%arg0: i32, %arg1: i32) -> (i32, i32) {
    %c5_i32 = arith.constant 5 : i32
    %0 = arith.addi %c5_i32, %arg1 : i32
    %c0_i32 = arith.constant 0 : i32
    return %arg0, %0 : i32, i32
  }
  func.func @transform_1(%arg0: i32, %arg1: i32) -> (i32, i32) {
    %c0_i32 = arith.constant 0 : i32
    %c0_i32_0 = arith.constant 0 : i32
    return %arg1, %c0_i32 : i32, i32
  }
  func.func @transform_2(%arg0: i32, %arg1: i32) -> (i32, i32) {
    %c0_i32 = arith.constant 0 : i32
    %c0_i32_0 = arith.constant 0 : i32
    %c0_i32_1 = arith.constant 0 : i32
    return %c0_i32, %c0_i32_0 : i32, i32
  }
  func.func @transform_3(%arg0: i32, %arg1: i32) -> (i32, i32) {
    %c0_i32 = arith.constant 0 : i32
    %c0_i32_0 = arith.constant 0 : i32
    %c0_i32_1 = arith.constant 0 : i32
    return %c0_i32, %c0_i32_0 : i32, i32
  }
  func.func @transform_4(%arg0: i32, %arg1: i32) -> (i32, i32) {
    %c0_i32 = arith.constant 0 : i32
    %c0_i32_0 = arith.constant 0 : i32
    %c0_i32_1 = arith.constant 0 : i32
    return %c0_i32, %c0_i32_0 : i32, i32
  }
  func.func @transform_5(%arg0: i32, %arg1: i32) -> (i32, i32) {
    %c0_i32 = arith.constant 0 : i32
    %c0_i32_0 = arith.constant 0 : i32
    %c0_i32_1 = arith.constant 0 : i32
    return %c0_i32, %c0_i32_0 : i32, i32
  }
  func.func @transform_6(%arg0: i32, %arg1: i32) -> (i32, i32) {
    %c0_i32 = arith.constant 0 : i32
    %c0_i32_0 = arith.constant 0 : i32
    return %arg0, %c0_i32 : i32, i32
  }
}

</mosaic_0001>

<llo_original>
// kernel: layernormnet_forward.1
$region0: #{layernormnet_forward.1}
  #allocation0 [shape = 'u32[]', space=smem, size = 0x4, offset = 0x4, fixed_abs, tag = 'smem constant byte address 0x4 - core index']
  #allocation1 [shape = 'u32[72,128]{1,0:T(1,128)}', space=vmem, size = 0x9000, scoped, tag = 'internal scratch']
  #allocation2 [shape = 'f32[128,128]{1,0:T(8,128)}', space=vmem, size = 0x10000, scoped, tag = 'scratch operand']
  %s0 = inlined_call_operand.hbm [shape: f32[256,4608], index: 0, kind: input, shape index: {}]
  %s1 = inlined_call_operand.vmem [shape: bf16[2048,128], index: 1, kind: input, shape index: {}]
  %s2 = inlined_call_operand.vmem [shape: bf16[128,128], index: 2, kind: input, shape index: {}]
  %s3 = inlined_call_operand.vmem [shape: bf16[128,128], index: 3, kind: input, shape index: {}]
  %s4 = inlined_call_operand.vmem [shape: f32[8,128], index: 4, kind: input, shape index: {}]
  %s5 = inlined_call_operand.hbm [shape: f32[1,128], index: 5, kind: input, shape index: {}]
  %s6 = inlined_call_operand.hbm [shape: f32[256,128], index: 6, kind: output, shape index: {}]
  %s7 = sld [smem:[#allocation0]]
  $region73: #{layernormnet_forward.1} parent=0
    _
  %s9 = ssub.s32 1, %s7
  %s10 = scalar_select 0, %s9, %s7
  $region1: #{layernormnet_forward.1} parent=0
    #allocation3 [shape = 'u8[524288]{0}', space=vmem, size = 0x80000, scoped, tag = 'input window, operand 0']
    #allocation4 [shape = 's32[2]{0}', space=sflag, size = 0x8, scoped, tag = 'scoped memory for layernormnet_forward.1']
    #allocation5 [shape = 's32[2]{0}', space=sflag, size = 0x8, scoped, tag = 'scoped memory for layernormnet_forward.1']
    #allocation6 [shape = 'u8[512]{0}', space=vmem, size = 0x400, scoped, tag = 'input window, operand 5, single buffered']
    #allocation7 [shape = 's32[1]{0}', space=sflag, size = 0x4, scoped, tag = 'scoped memory for layernormnet_forward.1']
    #allocation8 [shape = 'u8[131072]{0}', space=vmem, size = 0x20000, scoped, tag = 'output window, operand 0']
    %11 = vsyncpa [#allocation4], 0
    %s12 = scalar_lea.sflag [#allocation4], 1
    %13 = vsyncpa %s12, 0
    %14 = vsyncpa [#allocation7], 0
    %15 = vsyncpa [#allocation5], 0
    %s16 = scalar_lea.sflag [#allocation5], 1
    %17 = vsyncpa %s16, 0
    loop: start=0, step=1, limit=10
    $region2: #{layernormnet_forward.1} parent=1 // loop_pre_header
      _
    $region3: #{layernormnet_forward.1} parent=1 // loop_header
      %s19 = sphi 0, %s23
      %p20 = scmp.ge.s32.totalorder %s19, 10
      %s26 = sphi 0, %s38
      %s27 = sphi 0, %s34
      %s28 = sphi 0, %s26
      %s29 = sphi 0, %s27
      %s30 = sphi 0, %s28
      %s31 = sphi 0, %s29
      %s45 = sphi 0, %s47
      %s48 = sphi 0, %s45
      %s49 = sphi 0, %s48
      %s65 = sphi 0, %s49
      %s71 = sphi 0, %s73
      %s74 = sphi 0, %s71
      %s75 = sphi 0, %s74
      %s91 = sphi 0, %s75
      %s95 = sphi 0, %s95
      %s97 = sphi 0, %s95
      %s98 = sphi 0, %s97
      %s112 = sphi 0, %s98
      %s116 = sphi 0, %s116
      %s118 = sphi 0, %s116
      %s119 = sphi 0, %s118
      %s133 = sphi 0, %s119
      %s137 = sphi 0, %s137
      %s139 = sphi 0, %s137
      %s140 = sphi 0, %s139
      %s154 = sphi 0, %s140
      %s158 = sphi 0, %s158
      %s160 = sphi 0, %s158
      %s161 = sphi 0, %s160
      %s175 = sphi 0, %s161
      %s181 = sphi 0, %s183
      %s184 = sphi 0, %s181
      %s185 = sphi 0, %s184
      %s201 = sphi 0, %s185
    $region4: #{layernormnet_forward.1} parent=1 // loop_header_branch
      %22 = sbr.rel (%p20) target = $region8
    $region5: #{layernormnet_forward.1} parent=1 // loop_body
      %s24 = ssub.s32 %s19, 1
      %s25 = ssub.s32 %s19, 2
      %s32 = sadd.s32 1, %s27
      %p33 = scmp.ge.s32.totalorder %s32, 4
      %s34 = scalar_select %p33, 0, %s32
      %s35 = sadd.s32 1, %s26
      %s36 = scalar_select %p33, %s35, %s26
      %p37 = scmp.ge.s32.totalorder %s36, 2
      %s38 = scalar_select %p37, 0, %s36
      %s39 = sadd.s32 %s27, 5
      %s40 = sadd.s32 %s34, 5
      %s41 = ssub.s32 %s26, %s38
      %s42 = ssub.s32 %s39, %s40
      %s43 = sor.u32 %s41, %s42
      %p44 = scmp.eq.s32.totalorder %s43, 0
      %s46 = sadd.s32 %s45, 1
      %s47 = scalar_select %p44, %s45, %s46
      %p50 = pneg %p44
      %p51 = scmp.eq.s32.totalorder %s19, 7
      %p52 = por %p50, %p51
      %p53 = scmp.ne.s32.totalorder %s45, %s48
      %p54 = scmp.eq.s32.totalorder %s19, 0
      %p55 = por %p53, %p54
      %p56 = scmp.ne.s32.totalorder %s45, %s48
      %p57 = scmp.eq.s32.totalorder %s24, 7
      %p58 = por %p56, %p57
      %p59 = scmp.ne.s32.totalorder %s48, %s49
      %p60 = scmp.eq.s32.totalorder %s24, 0
      %p61 = por %p59, %p60
      %p62 = scmp.ne.s32.totalorder %s48, %s49
      %p63 = scmp.eq.s32.totalorder %s25, 7
      %p64 = por %p62, %p63
      %p66 = scmp.ne.s32.totalorder %s49, %s65
      %p67 = scmp.eq.s32.totalorder %s25, 0
      %p68 = por %p66, %p67
      %s69 = ssub.s32 %s27, %s34
      %p70 = scmp.eq.s32.totalorder %s69, 0
      %s72 = sadd.s32 %s71, 1
      %s73 = scalar_select %p70, %s71, %s72
      %p76 = pneg %p70
      %p77 = scmp.eq.s32.totalorder %s19, 7
      %p78 = por %p76, %p77
      %p79 = scmp.ne.s32.totalorder %s71, %s74
      %p80 = scmp.eq.s32.totalorder %s19, 0
      %p81 = por %p79, %p80
      %p82 = scmp.ne.s32.totalorder %s71, %s74
      %p83 = scmp.eq.s32.totalorder %s24, 7
      %p84 = por %p82, %p83
      %p85 = scmp.ne.s32.totalorder %s74, %s75
      %p86 = scmp.eq.s32.totalorder %s24, 0
      %p87 = por %p85, %p86
      %p88 = scmp.ne.s32.totalorder %s74, %s75
      %p89 = scmp.eq.s32.totalorder %s25, 7
      %p90 = por %p88, %p89
      %p92 = scmp.ne.s32.totalorder %s75, %s91
      %p93 = scmp.eq.s32.totalorder %s25, 0
      %p94 = por %p92, %p93
      %s96 = sadd.s32 %s95, 1
      %p99 = scmp.eq.s32.totalorder %s19, 7
      %p100 = scmp.ne.s32.totalorder %s95, %s97
      %p101 = scmp.eq.s32.totalorder %s19, 0
      %p102 = por %p100, %p101
      %p103 = scmp.ne.s32.totalorder %s95, %s97
      %p104 = scmp.eq.s32.totalorder %s24, 7
      %p105 = por %p103, %p104
      %p106 = scmp.ne.s32.totalorder %s97, %s98
      %p107 = scmp.eq.s32.totalorder %s24, 0
      %p108 = por %p106, %p107
      %p109 = scmp.ne.s32.totalorder %s97, %s98
      %p110 = scmp.eq.s32.totalorder %s25, 7
      %p111 = por %p109, %p110
      %p113 = scmp.ne.s32.totalorder %s98, %s112
      %p114 = scmp.eq.s32.totalorder %s25, 0
      %p115 = por %p113, %p114
      %s117 = sadd.s32 %s116, 1
      %p120 = scmp.eq.s32.totalorder %s19, 7
      %p121 = scmp.ne.s32.totalorder %s116, %s118
      %p122 = scmp.eq.s32.totalorder %s19, 0
      %p123 = por %p121, %p122
      %p124 = scmp.ne.s32.totalorder %s116, %s118
      %p125 = scmp.eq.s32.totalorder %s24, 7
      %p126 = por %p124, %p125
      %p127 = scmp.ne.s32.totalorder %s118, %s119
      %p128 = scmp.eq.s32.totalorder %s24, 0
      %p129 = por %p127, %p128
      %p130 = scmp.ne.s32.totalorder %s118, %s119
      %p131 = scmp.eq.s32.totalorder %s25, 7
      %p132 = por %p130, %p131
      %p134 = scmp.ne.s32.totalorder %s119, %s133
      %p135 = scmp.eq.s32.totalorder %s25, 0
      %p136 = por %p134, %p135
      %s138 = sadd.s32 %s137, 1
      %p141 = scmp.eq.s32.totalorder %s19, 7
      %p142 = scmp.ne.s32.totalorder %s137, %s139
      %p143 = scmp.eq.s32.totalorder %s19, 0
      %p144 = por %p142, %p143
      %p145 = scmp.ne.s32.totalorder %s137, %s139
      %p146 = scmp.eq.s32.totalorder %s24, 7
      %p147 = por %p145, %p146
      %p148 = scmp.ne.s32.totalorder %s139, %s140
      %p149 = scmp.eq.s32.totalorder %s24, 0
      %p150 = por %p148, %p149
      %p151 = scmp.ne.s32.totalorder %s139, %s140
      %p152 = scmp.eq.s32.totalorder %s25, 7
      %p153 = por %p151, %p152
      %p155 = scmp.ne.s32.totalorder %s140, %s154
      %p156 = scmp.eq.s32.totalorder %s25, 0
      %p157 = por %p155, %p156
      %s159 = sadd.s32 %s158, 1
      %p162 = scmp.eq.s32.totalorder %s19, 7
      %p163 = scmp.ne.s32.totalorder %s158, %s160
      %p164 = scmp.eq.s32.totalorder %s19, 0
      %p165 = por %p163, %p164
      %p166 = scmp.ne.s32.totalorder %s158, %s160
      %p167 = scmp.eq.s32.totalorder %s24, 7
      %p168 = por %p166, %p167
      %p169 = scmp.ne.s32.totalorder %s160, %s161
      %p170 = scmp.eq.s32.totalorder %s24, 0
      %p171 = por %p169, %p170
      %p172 = scmp.ne.s32.totalorder %s160, %s161
      %p173 = scmp.eq.s32.totalorder %s25, 7
      %p174 = por %p172, %p173
      %p176 = scmp.ne.s32.totalorder %s161, %s175
      %p177 = scmp.eq.s32.totalorder %s25, 0
      %p178 = por %p176, %p177
      %s179 = ssub.s32 %s26, %s38
      %p180 = scmp.eq.s32.totalorder %s179, 0
      %s182 = sadd.s32 %s181, 1
      %s183 = scalar_select %p180, %s181, %s182
      %p186 = pneg %p180
      %p187 = scmp.eq.s32.totalorder %s19, 7
      %p188 = por %p186, %p187
      %p189 = scmp.ne.s32.totalorder %s181, %s184
      %p190 = scmp.eq.s32.totalorder %s19, 0
      %p191 = por %p189, %p190
      %p192 = scmp.ne.s32.totalorder %s181, %s184
      %p193 = scmp.eq.s32.totalorder %s24, 7
      %p194 = por %p192, %p193
      %p195 = scmp.ne.s32.totalorder %s184, %s185
      %p196 = scmp.eq.s32.totalorder %s24, 0
      %p197 = por %p195, %p196
      %p198 = scmp.ne.s32.totalorder %s184, %s185
      %p199 = scmp.eq.s32.totalorder %s25, 7
      %p200 = por %p198, %p199
      %p202 = scmp.ne.s32.totalorder %s185, %s201
      %p203 = scmp.eq.s32.totalorder %s25, 0
      %p204 = por %p202, %p203
      %p205 = scmp.le.s32.totalorder 1, %s19
      %p206 = scmp.lt.s32.totalorder %s19, 9
      %p207 = pnand %p205, %p206
      %p208 = pneg %p207
      // Predicated region
      $region9: #{layernormnet_forward.1} parent=5 // pred_check
        _
      $region10: #{layernormnet_forward.1} parent=5 // pred_check_branch
        %210 = sbr.rel (%p207) target = $region12
      $region11: #{layernormnet_forward.1} parent=5 // pred_region
        %s211 = ssub.s32 %s19, 1
        // Predicated region
        $region13: #{layernormnet_forward.1} parent=11 // pred_check
          %p212 = pneg %p108
        $region14: #{layernormnet_forward.1} parent=11 // pred_check_branch
          %214 = sbr.rel (%p212) target = $region16
        $region15: #{layernormnet_forward.1} parent=11 // pred_region
          _
        $region16: #{layernormnet_forward.1} parent=11 // pred_fallthru
          _
        // Predicated region
        $region17: #{layernormnet_forward.1} parent=11 // pred_check
          %p215 = pneg %p129
        $region18: #{layernormnet_forward.1} parent=11 // pred_check_branch
          %217 = sbr.rel (%p215) target = $region20
        $region19: #{layernormnet_forward.1} parent=11 // pred_region
          _
        $region20: #{layernormnet_forward.1} parent=11 // pred_fallthru
          _
        // Predicated region
        $region21: #{layernormnet_forward.1} parent=11 // pred_check
          %p218 = pneg %p150
        $region22: #{layernormnet_forward.1} parent=11 // pred_check_branch
          %220 = sbr.rel (%p218) target = $region24
        $region23: #{layernormnet_forward.1} parent=11 // pred_region
          _
        $region24: #{layernormnet_forward.1} parent=11 // pred_fallthru
          _
        // Predicated region
        $region25: #{layernormnet_forward.1} parent=11 // pred_check
          %p221 = pneg %p171
        $region26: #{layernormnet_forward.1} parent=11 // pred_check_branch
          %223 = sbr.rel (%p221) target = $region28
        $region27: #{layernormnet_forward.1} parent=11 // pred_region
          %225 = vsyncadd [#allocation7], 0
          %s227 = sshll.u32 %s5, 4
          %s228 = int_to_ptr.hbm [resolvable:$true] %s227
          %s229 = sshll.u32 [#allocation6], 4
          %s230 = int_to_ptr.vmem [resolvable:$true] %s229
          %232 = dma.hbm_to_vmem [thread:$0]  %s228, 16, %s230, [#allocation7]
        $region28: #{layernormnet_forward.1} parent=11 // pred_fallthru
          _
      $region12: #{layernormnet_forward.1} parent=5 // pred_fallthru
        _
      %p233 = scmp.lt.s32.totalorder %s19, 8
      // Predicated region
      $region29: #{layernormnet_forward.1} parent=5 // pred_check
        %p234 = pneg %p233
      $region30: #{layernormnet_forward.1} parent=5 // pred_check_branch
        %236 = sbr.rel (%p234) target = $region32
      $region31: #{layernormnet_forward.1} parent=5 // pred_region
        // Predicated region
        $region33: #{layernormnet_forward.1} parent=31 // pred_check
          %p237 = pneg %p55
        $region34: #{layernormnet_forward.1} parent=31 // pred_check_branch
          %239 = sbr.rel (%p237) target = $region36
        $region35: #{layernormnet_forward.1} parent=31 // pred_region
          %s240 = sand.u32 %s45, 1
          %s241 = scalar_lea.sflag [#allocation4], %s240
          %s242 = sand.u32 %s45, 1
          %s243 = smul.addr %s242, 512
          %s244 = scalar_lea.vmem [#allocation3], %s243
          %s245 = sadd.s32 %s27, 5
          %s246 = smul.u32 16, %s26
          %s247 = smul.u32 4, %s245
          %249 = vsyncadd %s241, 0
          %s250 = smul.addr %s246, 36
          %s251 = sadd.s32 %s247, %s250
          %s252 = smul.addr %s251, 8
          %s253 = scalar_lea.hbm %s0, %s252
          %s254 = sshll.u32 %s253, 4
          %s255 = int_to_ptr.hbm [resolvable:$true] %s254
          %s256 = sshll.u32 %s244, 4
          %s257 = int_to_ptr.vmem [resolvable:$true] %s256
          %262 = dma.hbm_to_vmem [thread:$0]  %s255, 8192, %s257, %s241, 4608, 512, 32
        $region36: #{layernormnet_forward.1} parent=31 // pred_fallthru
          _
        // Predicated region
        $region37: #{layernormnet_forward.1} parent=31 // pred_check
          %p263 = pneg %p81
        $region38: #{layernormnet_forward.1} parent=31 // pred_check_branch
          %265 = sbr.rel (%p263) target = $region40
        $region39: #{layernormnet_forward.1} parent=31 // pred_region
          %s266 = smul.u32 64, %s27
          %p267 = scmp.lt.s32.totalorder %s266, 255
          %s268 = scalar_select %p267, %s266, 255
          %s269 = smul.addr %s268, 4
          %s270 = scalar_lea.vmem %s1, %s269
          %s271 = smul.u32 64, %s27
        $region40: #{layernormnet_forward.1} parent=31 // pred_fallthru
          _
      $region32: #{layernormnet_forward.1} parent=5 // pred_fallthru
        _
      %p272 = scmp.le.s32.totalorder 1, %s19
      %p273 = scmp.lt.s32.totalorder %s19, 9
      %p274 = pnand %p272, %p273
      %p275 = pneg %p274
      // Predicated region
      $region41: #{layernormnet_forward.1} parent=5 // pred_check
        _
      $region42: #{layernormnet_forward.1} parent=5 // pred_check_branch
        %277 = sbr.rel (%p274) target = $region44
      $region43: #{layernormnet_forward.1} parent=5 // pred_region
        %s278 = ssub.s32 %s19, 1
        %s279 = sand.u32 %s48, 1
        %s280 = scalar_lea.sflag [#allocation4], %s279
        %s281 = sand.u32 %s48, 1
        %s282 = smul.addr %s281, 512
        %s283 = scalar_lea.vmem [#allocation3], %s282
        // Predicated region
        $region45: #{layernormnet_forward.1} parent=43 // pred_check
          %p284 = pneg %p61
        $region46: #{layernormnet_forward.1} parent=43 // pred_check_branch
          %286 = sbr.rel (%p284) target = $region48
        $region47: #{layernormnet_forward.1} parent=43 // pred_region
          %288 = dma.done %s280, 8192
        $region48: #{layernormnet_forward.1} parent=43 // pred_fallthru
          _
        // Predicated region
        $region49: #{layernormnet_forward.1} parent=43 // pred_check
          %p289 = pneg %p171
        $region50: #{layernormnet_forward.1} parent=43 // pred_check_branch
          %291 = sbr.rel (%p289) target = $region52
        $region51: #{layernormnet_forward.1} parent=43 // pred_region
          %293 = dma.done [#allocation7], 16
        $region52: #{layernormnet_forward.1} parent=43 // pred_fallthru
          _
        %s294 = sand.u32 %s48, 1
        %s295 = scalar_lea.sflag [#allocation4], %s294
        %s296 = sand.u32 %s48, 1
        %s297 = smul.addr %s296, 512
        %s298 = scalar_lea.vmem [#allocation3], %s297
        %p299 = pneg %p61
        %p300 = pneg %p58
        %s301 = smul.u32 64, %s29
        %p302 = scmp.lt.s32.totalorder %s301, 255
        %s303 = scalar_select %p302, %s301, 255
        %s304 = smul.addr %s303, 4
        %s305 = scalar_lea.vmem %s1, %s304
        %p306 = pneg %p87
        %p307 = pneg %p84
        %p308 = pneg %p108
        %p309 = pneg %p105
        %p310 = pneg %p129
        %p311 = pneg %p126
        %p312 = pneg %p150
        %p313 = pneg %p147
        %p314 = pneg %p171
        %p315 = pneg %p168
        %p316 = pneg %p197
        %p317 = pneg %p194
        %s318 = sand.u32 %s184, 1
        %s319 = scalar_lea.sflag [#allocation5], %s318
        %s320 = sand.u32 %s184, 1
        %s321 = smul.addr %s320, 128
        %s322 = scalar_lea.vmem [#allocation8], %s321
        %s323 = sadd.s32 %s29, 5
        %s324 = smul.u32 16, %s28
        %s325 = smul.u32 4, %s323
        %s326 = smul.u32 64, %s29
        %p327 = scmp.lt.s32.totalorder %s326, 255
        %s328 = scalar_select %p327, %s326, 255
        %s329 = smul.addr %s328, 4
        %s330 = scalar_lea.vmem %s1, %s329
        %s331 = smul.u32 64, %s29
        %s332 = smul.u32 16, %s28
        %p333 = scmp.eq.s32.totalorder %s29, 0
        // Predicated region
        $region53: #{layernormnet_forward.1} parent=43 // pred_check
          %p334 = pneg %p333
        $region54: #{layernormnet_forward.1} parent=43 // pred_check_branch
          %336 = sbr.rel (%p334) target = $region56
        $region55: #{layernormnet_forward.1} parent=43 // pred_region
          %337 = vst [vmem:[#allocation2] sm:$0xff] 0.0
          %338 = vst [vmem:[#allocation2 + $0x8] sm:$0xff] 0.0
          %339 = vst [vmem:[#allocation2 + $0x10] sm:$0xff] 0.0
          %340 = vst [vmem:[#allocation2 + $0x18] sm:$0xff] 0.0
          %341 = vst [vmem:[#allocation2 + $0x20] sm:$0xff] 0.0
          %342 = vst [vmem:[#allocation2 + $0x28] sm:$0xff] 0.0
          %343 = vst [vmem:[#allocation2 + $0x30] sm:$0xff] 0.0
          %344 = vst [vmem:[#allocation2 + $0x38] sm:$0xff] 0.0
          %345 = vst [vmem:[#allocation2 + $0x40] sm:$0xff] 0.0
          %346 = vst [vmem:[#allocation2 + $0x48] sm:$0xff] 0.0
          %347 = vst [vmem:[#allocation2 + $0x50] sm:$0xff] 0.0
          %348 = vst [vmem:[#allocation2 + $0x58] sm:$0xff] 0.0
          %349 = vst [vmem:[#allocation2 + $0x60] sm:$0xff] 0.0
          %350 = vst [vmem:[#allocation2 + $0x68] sm:$0xff] 0.0
          %351 = vst [vmem:[#allocation2 + $0x70] sm:$0xff] 0.0
          %352 = vst [vmem:[#allocation2 + $0x78] sm:$0xff] 0.0
        $region56: #{layernormnet_forward.1} parent=43 // pred_fallthru
          _
        %v353 = vld [vmem:[#allocation2] sm:$0xff]
        %v354 = vld [vmem:[#allocation2 + $0x8] sm:$0xff]
        %v355 = vld [vmem:[#allocation2 + $0x10] sm:$0xff]
        %v356 = vld [vmem:[#allocation2 + $0x18] sm:$0xff]
        %v357 = vld [vmem:[#allocation2 + $0x20] sm:$0xff]
        %v358 = vld [vmem:[#allocation2 + $0x28] sm:$0xff]
        %v359 = vld [vmem:[#allocation2 + $0x30] sm:$0xff]
        %v360 = vld [vmem:[#allocation2 + $0x38] sm:$0xff]
        %v361 = vld [vmem:[#allocation2 + $0x40] sm:$0xff]
        %v362 = vld [vmem:[#allocation2 + $0x48] sm:$0xff]
        %v363 = vld [vmem:[#allocation2 + $0x50] sm:$0xff]
        %v364 = vld [vmem:[#allocation2 + $0x58] sm:$0xff]
        %v365 = vld [vmem:[#allocation2 + $0x60] sm:$0xff]
        %v366 = vld [vmem:[#allocation2 + $0x68] sm:$0xff]
        %v367 = vld [vmem:[#allocation2 + $0x70] sm:$0xff]
        %v368 = vld [vmem:[#allocation2 + $0x78] sm:$0xff]
        %v369 = vld [vmem:[%s283] sm:$0xff]
        %v370 = vld [vmem:[%s283 + $0x8] sm:$0xff]
        %v371 = vld [vmem:[%s283 + $0x10] sm:$0xff]
        %v372 = vld [vmem:[%s283 + $0x18] sm:$0xff]
        %v373 = vld [vmem:[%s283 + $0x20] sm:$0xff]
        %v374 = vld [vmem:[%s283 + $0x28] sm:$0xff]
        %v375 = vld [vmem:[%s283 + $0x30] sm:$0xff]
        %v376 = vld [vmem:[%s283 + $0x38] sm:$0xff]
        %v377 = vld [vmem:[%s283 + $0x40] sm:$0xff]
        %v378 = vld [vmem:[%s283 + $0x48] sm:$0xff]
        %v379 = vld [vmem:[%s283 + $0x50] sm:$0xff]
        %v380 = vld [vmem:[%s283 + $0x58] sm:$0xff]
        %v381 = vld [vmem:[%s283 + $0x60] sm:$0xff]
        %v382 = vld [vmem:[%s283 + $0x68] sm:$0xff]
        %v383 = vld [vmem:[%s283 + $0x70] sm:$0xff]
        %v384 = vld [vmem:[%s283 + $0x78] sm:$0xff]
        %v385 = vld [vmem:[%s283 + $0x80] sm:$0xff]
        %v386 = vld [vmem:[%s283 + $0x88] sm:$0xff]
        %v387 = vld [vmem:[%s283 + $0x90] sm:$0xff]
        %v388 = vld [vmem:[%s283 + $0x98] sm:$0xff]
        %v389 = vld [vmem:[%s283 + $0xa0] sm:$0xff]
        %v390 = vld [vmem:[%s283 + $0xa8] sm:$0xff]
        %v391 = vld [vmem:[%s283 + $0xb0] sm:$0xff]
        %v392 = vld [vmem:[%s283 + $0xb8] sm:$0xff]
        %v393 = vld [vmem:[%s283 + $0xc0] sm:$0xff]
        %v394 = vld [vmem:[%s283 + $0xc8] sm:$0xff]
        %v395 = vld [vmem:[%s283 + $0xd0] sm:$0xff]
        %v396 = vld [vmem:[%s283 + $0xd8] sm:$0xff]
        %v397 = vld [vmem:[%s283 + $0xe0] sm:$0xff]
        %v398 = vld [vmem:[%s283 + $0xe8] sm:$0xff]
        %v399 = vld [vmem:[%s283 + $0xf0] sm:$0xff]
        %v400 = vld [vmem:[%s283 + $0xf8] sm:$0xff]
        %v401 = vld [vmem:[%s283 + $0x100] sm:$0xff]
        %v402 = vld [vmem:[%s283 + $0x108] sm:$0xff]
        %v403 = vld [vmem:[%s283 + $0x110] sm:$0xff]
        %v404 = vld [vmem:[%s283 + $0x118] sm:$0xff]
        %v405 = vld [vmem:[%s283 + $0x120] sm:$0xff]
        %v406 = vld [vmem:[%s283 + $0x128] sm:$0xff]
        %v407 = vld [vmem:[%s283 + $0x130] sm:$0xff]
        %v408 = vld [vmem:[%s283 + $0x138] sm:$0xff]
        %v409 = vld [vmem:[%s283 + $0x140] sm:$0xff]
        %v410 = vld [vmem:[%s283 + $0x148] sm:$0xff]
        %v411 = vld [vmem:[%s283 + $0x150] sm:$0xff]
        %v412 = vld [vmem:[%s283 + $0x158] sm:$0xff]
        %v413 = vld [vmem:[%s283 + $0x160] sm:$0xff]
        %v414 = vld [vmem:[%s283 + $0x168] sm:$0xff]
        %v415 = vld [vmem:[%s283 + $0x170] sm:$0xff]
        %v416 = vld [vmem:[%s283 + $0x178] sm:$0xff]
        %v417 = vld [vmem:[%s283 + $0x180] sm:$0xff]
        %v418 = vld [vmem:[%s283 + $0x188] sm:$0xff]
        %v419 = vld [vmem:[%s283 + $0x190] sm:$0xff]
        %v420 = vld [vmem:[%s283 + $0x198] sm:$0xff]
        %v421 = vld [vmem:[%s283 + $0x1a0] sm:$0xff]
        %v422 = vld [vmem:[%s283 + $0x1a8] sm:$0xff]
        %v423 = vld [vmem:[%s283 + $0x1b0] sm:$0xff]
        %v424 = vld [vmem:[%s283 + $0x1b8] sm:$0xff]
        %v425 = vld [vmem:[%s283 + $0x1c0] sm:$0xff]
        %v426 = vld [vmem:[%s283 + $0x1c8] sm:$0xff]
        %v427 = vld [vmem:[%s283 + $0x1d0] sm:$0xff]
        %v428 = vld [vmem:[%s283 + $0x1d8] sm:$0xff]
        %v429 = vld [vmem:[%s283 + $0x1e0] sm:$0xff]
        %v430 = vld [vmem:[%s283 + $0x1e8] sm:$0xff]
        %v431 = vld [vmem:[%s283 + $0x1f0] sm:$0xff]
        %v432 = vld [vmem:[%s283 + $0x1f8] sm:$0xff]
        %v433 = vpack.c.bf16 %v373, %v369
        %v434 = vpack.c.bf16 %v374, %v370
        %v435 = vpack.c.bf16 %v375, %v371
        %v436 = vpack.c.bf16 %v376, %v372
        %v437 = vpack.c.bf16 %v381, %v377
        %v438 = vpack.c.bf16 %v382, %v378
        %v439 = vpack.c.bf16 %v383, %v379
        %v440 = vpack.c.bf16 %v384, %v380
        %v441 = vpack.c.bf16 %v389, %v385
        %v442 = vpack.c.bf16 %v390, %v386
        %v443 = vpack.c.bf16 %v391, %v387
        %v444 = vpack.c.bf16 %v392, %v388
        %v445 = vpack.c.bf16 %v397, %v393
        %v446 = vpack.c.bf16 %v398, %v394
        %v447 = vpack.c.bf16 %v399, %v395
        %v448 = vpack.c.bf16 %v400, %v396
        %v449 = vpack.c.bf16 %v405, %v401
        %v450 = vpack.c.bf16 %v406, %v402
        %v451 = vpack.c.bf16 %v407, %v403
        %v452 = vpack.c.bf16 %v408, %v404
        %v453 = vpack.c.bf16 %v413, %v409
        %v454 = vpack.c.bf16 %v414, %v410
        %v455 = vpack.c.bf16 %v415, %v411
        %v456 = vpack.c.bf16 %v416, %v412
        %v457 = vpack.c.bf16 %v421, %v417
        %v458 = vpack.c.bf16 %v422, %v418
        %v459 = vpack.c.bf16 %v423, %v419
        %v460 = vpack.c.bf16 %v424, %v420
        %v461 = vpack.c.bf16 %v429, %v425
        %v462 = vpack.c.bf16 %v430, %v426
        %v463 = vpack.c.bf16 %v431, %v427
        %v464 = vpack.c.bf16 %v432, %v428
        %v465 = vld [vmem:[%s330] sm:$0xf]
        %v466 = vld [vmem:[%s330 + $0x4] sm:$0xf]
        %v467 = vld [vmem:[%s330 + $0x8] sm:$0xf]
        %v468 = vld [vmem:[%s330 + $0xc] sm:$0xf]
        %v469 = vld [vmem:[%s330 + $0x10] sm:$0xf]
        %v470 = vld [vmem:[%s330 + $0x14] sm:$0xf]
        %v471 = vld [vmem:[%s330 + $0x18] sm:$0xf]
        %v472 = vld [vmem:[%s330 + $0x1c] sm:$0xf]
        %v473 = vld [vmem:[%s330 + $0x20] sm:$0xf]
        %v474 = vld [vmem:[%s330 + $0x24] sm:$0xf]
        %v475 = vld [vmem:[%s330 + $0x28] sm:$0xf]
        %v476 = vld [vmem:[%s330 + $0x2c] sm:$0xf]
        %v477 = vld [vmem:[%s330 + $0x30] sm:$0xf]
        %v478 = vld [vmem:[%s330 + $0x34] sm:$0xf]
        %v479 = vld [vmem:[%s330 + $0x38] sm:$0xf]
        %v480 = vld [vmem:[%s330 + $0x3c] sm:$0xf]
        %v481 = vld [vmem:[%s330 + $0x40] sm:$0xf]
        %v482 = vld [vmem:[%s330 + $0x44] sm:$0xf]
        %v483 = vld [vmem:[%s330 + $0x48] sm:$0xf]
        %v484 = vld [vmem:[%s330 + $0x4c] sm:$0xf]
        %v485 = vld [vmem:[%s330 + $0x50] sm:$0xf]
        %v486 = vld [vmem:[%s330 + $0x54] sm:$0xf]
        %v487 = vld [vmem:[%s330 + $0x58] sm:$0xf]
        %v488 = vld [vmem:[%s330 + $0x5c] sm:$0xf]
        %v489 = vld [vmem:[%s330 + $0x60] sm:$0xf]
        %v490 = vld [vmem:[%s330 + $0x64] sm:$0xf]
        %v491 = vld [vmem:[%s330 + $0x68] sm:$0xf]
        %v492 = vld [vmem:[%s330 + $0x6c] sm:$0xf]
        %v493 = vld [vmem:[%s330 + $0x70] sm:$0xf]
        %v494 = vld [vmem:[%s330 + $0x74] sm:$0xf]
        %v495 = vld [vmem:[%s330 + $0x78] sm:$0xf]
        %v496 = vld [vmem:[%s330 + $0x7c] sm:$0xf]
        %v497 = vld [vmem:[%s330 + $0x80] sm:$0xf]
        %v498 = vld [vmem:[%s330 + $0x84] sm:$0xf]
        %v499 = vld [vmem:[%s330 + $0x88] sm:$0xf]
        %v500 = vld [vmem:[%s330 + $0x8c] sm:$0xf]
        %v501 = vld [vmem:[%s330 + $0x90] sm:$0xf]
        %v502 = vld [vmem:[%s330 + $0x94] sm:$0xf]
        %v503 = vld [vmem:[%s330 + $0x98] sm:$0xf]
        %v504 = vld [vmem:[%s330 + $0x9c] sm:$0xf]
        %v505 = vld [vmem:[%s330 + $0xa0] sm:$0xf]
        %v506 = vld [vmem:[%s330 + $0xa4] sm:$0xf]
        %v507 = vld [vmem:[%s330 + $0xa8] sm:$0xf]
        %v508 = vld [vmem:[%s330 + $0xac] sm:$0xf]
        %v509 = vld [vmem:[%s330 + $0xb0] sm:$0xf]
        %v510 = vld [vmem:[%s330 + $0xb4] sm:$0xf]
        %v511 = vld [vmem:[%s330 + $0xb8] sm:$0xf]
        %v512 = vld [vmem:[%s330 + $0xbc] sm:$0xf]
        %v513 = vld [vmem:[%s330 + $0xc0] sm:$0xf]
        %v514 = vld [vmem:[%s330 + $0xc4] sm:$0xf]
        %v515 = vld [vmem:[%s330 + $0xc8] sm:$0xf]
        %v516 = vld [vmem:[%s330 + $0xcc] sm:$0xf]
        %v517 = vld [vmem:[%s330 + $0xd0] sm:$0xf]
        %v518 = vld [vmem:[%s330 + $0xd4] sm:$0xf]
        %v519 = vld [vmem:[%s330 + $0xd8] sm:$0xf]
        %v520 = vld [vmem:[%s330 + $0xdc] sm:$0xf]
        %v521 = vld [vmem:[%s330 + $0xe0] sm:$0xf]
        %v522 = vld [vmem:[%s330 + $0xe4] sm:$0xf]
        %v523 = vld [vmem:[%s330 + $0xe8] sm:$0xf]
        %v524 = vld [vmem:[%s330 + $0xec] sm:$0xf]
        %v525 = vld [vmem:[%s330 + $0xf0] sm:$0xf]
        %v526 = vld [vmem:[%s330 + $0xf4] sm:$0xf]
        %v527 = vld [vmem:[%s330 + $0xf8] sm:$0xf]
        %v528 = vld [vmem:[%s330 + $0xfc] sm:$0xf]
        %v593 = vunpack.c.l.b16 %v465
        %v594 = vunpack.c.l.b16 %v466
        %v595 = vunpack.c.l.b16 %v467
        %v596 = vunpack.c.l.b16 %v468
        %v597 = vunpack.c.l.b16 %v469
        %v598 = vunpack.c.l.b16 %v470
        %v599 = vunpack.c.l.b16 %v471
        %v600 = vunpack.c.l.b16 %v472
        %v601 = vunpack.c.l.b16 %v473
        %v602 = vunpack.c.l.b16 %v474
        %v603 = vunpack.c.l.b16 %v475
        %v604 = vunpack.c.l.b16 %v476
        %v605 = vunpack.c.l.b16 %v477
        %v606 = vunpack.c.l.b16 %v478
        %v607 = vunpack.c.l.b16 %v479
        %v608 = vunpack.c.l.b16 %v480
        %v609 = vunpack.c.l.b16 %v481
        %v610 = vunpack.c.l.b16 %v482
        %v611 = vunpack.c.l.b16 %v483
        %v612 = vunpack.c.l.b16 %v484
        %v613 = vunpack.c.l.b16 %v485
        %v614 = vunpack.c.l.b16 %v486
        %v615 = vunpack.c.l.b16 %v487
        %v616 = vunpack.c.l.b16 %v488
        %v617 = vunpack.c.l.b16 %v489
        %v618 = vunpack.c.l.b16 %v490
        %v619 = vunpack.c.l.b16 %v491
        %v620 = vunpack.c.l.b16 %v492
        %v621 = vunpack.c.l.b16 %v493
        %v622 = vunpack.c.l.b16 %v494
        %v623 = vunpack.c.l.b16 %v495
        %v624 = vunpack.c.l.b16 %v496
        %v625 = vunpack.c.l.b16 %v497
        %v626 = vunpack.c.l.b16 %v498
        %v627 = vunpack.c.l.b16 %v499
        %v628 = vunpack.c.l.b16 %v500
        %v629 = vunpack.c.l.b16 %v501
        %v630 = vunpack.c.l.b16 %v502
        %v631 = vunpack.c.l.b16 %v503
        %v632 = vunpack.c.l.b16 %v504
        %v633 = vunpack.c.l.b16 %v505
        %v634 = vunpack.c.l.b16 %v506
        %v635 = vunpack.c.l.b16 %v507
        %v636 = vunpack.c.l.b16 %v508
        %v637 = vunpack.c.l.b16 %v509
        %v638 = vunpack.c.l.b16 %v510
        %v639 = vunpack.c.l.b16 %v511
        %v640 = vunpack.c.l.b16 %v512
        %v641 = vunpack.c.l.b16 %v513
        %v642 = vunpack.c.l.b16 %v514
        %v643 = vunpack.c.l.b16 %v515
        %v644 = vunpack.c.l.b16 %v516
        %v645 = vunpack.c.l.b16 %v517
        %v646 = vunpack.c.l.b16 %v518
        %v647 = vunpack.c.l.b16 %v519
        %v648 = vunpack.c.l.b16 %v520
        %v649 = vunpack.c.l.b16 %v521
        %v650 = vunpack.c.l.b16 %v522
        %v651 = vunpack.c.l.b16 %v523
        %v652 = vunpack.c.l.b16 %v524
        %v653 = vunpack.c.l.b16 %v525
        %v654 = vunpack.c.l.b16 %v526
        %v655 = vunpack.c.l.b16 %v527
        %v656 = vunpack.c.l.b16 %v528
        %v657 = vpack.c.b16 %v594, %v593
        %v658 = vpack.c.b16 %v596, %v595
        %v659 = vpack.c.b16 %v598, %v597
        %v660 = vpack.c.b16 %v600, %v599
        %v661 = vpack.c.b16 %v602, %v601
        %v662 = vpack.c.b16 %v604, %v603
        %v663 = vpack.c.b16 %v606, %v605
        %v664 = vpack.c.b16 %v608, %v607
        %v665 = vpack.c.b16 %v610, %v609
        %v666 = vpack.c.b16 %v612, %v611
        %v667 = vpack.c.b16 %v614, %v613
        %v668 = vpack.c.b16 %v616, %v615
        %v669 = vpack.c.b16 %v618, %v617
        %v670 = vpack.c.b16 %v620, %v619
        %v671 = vpack.c.b16 %v622, %v621
        %v672 = vpack.c.b16 %v624, %v623
        %v673 = vpack.c.b16 %v626, %v625
        %v674 = vpack.c.b16 %v628, %v627
        %v675 = vpack.c.b16 %v630, %v629
        %v676 = vpack.c.b16 %v632, %v631
        %v677 = vpack.c.b16 %v634, %v633
        %v678 = vpack.c.b16 %v636, %v635
        %v679 = vpack.c.b16 %v638, %v637
        %v680 = vpack.c.b16 %v640, %v639
        %v681 = vpack.c.b16 %v642, %v641
        %v682 = vpack.c.b16 %v644, %v643
        %v683 = vpack.c.b16 %v646, %v645
        %v684 = vpack.c.b16 %v648, %v647
        %v685 = vpack.c.b16 %v650, %v649
        %v686 = vpack.c.b16 %v652, %v651
        %v687 = vpack.c.b16 %v654, %v653
        %v688 = vpack.c.b16 %v656, %v655
        %721 = vmatpush.bf16.msra.mxu0 %v664
        %722 = vmatpush.bf16.msra.mxu0 %v663
        %723 = vmatpush.bf16.msra.mxu0 %v662
        %724 = vmatpush.bf16.msra.mxu0 %v661
        %725 = vmatpush.bf16.msra.mxu0 %v660
        %726 = vmatpush.bf16.msra.mxu0 %v659
        %727 = vmatpush.bf16.msra.mxu0 %v658
        %728 = vmatpush.bf16.msra.mxu0 %v657
        %729 = vmatmul.bf16.gmra.mxu0 %v433
        %v730 = vpop.f32.mrf.mxu0
        %v731 = vadd.f32 0.0, %v730
        %v732 = vpop.f32.mrf.mxu0
        %v733 = vadd.f32 0.0, %v732
        %734 = vmatmul.bf16.gmra.mxu0 %v437
        %v735 = vpop.f32.mrf.mxu0
        %v736 = vadd.f32 0.0, %v735
        %v737 = vpop.f32.mrf.mxu0
        %v738 = vadd.f32 0.0, %v737
        %739 = vmatmul.bf16.gmra.mxu0 %v441
        %v740 = vpop.f32.mrf.mxu0
        %v741 = vadd.f32 0.0, %v740
        %v742 = vpop.f32.mrf.mxu0
        %v743 = vadd.f32 0.0, %v742
        %744 = vmatmul.bf16.gmra.mxu0 %v445
        %v745 = vpop.f32.mrf.mxu0
        %v746 = vadd.f32 0.0, %v745
        %v747 = vpop.f32.mrf.mxu0
        %v748 = vadd.f32 0.0, %v747
        %749 = vmatmul.bf16.gmra.mxu0 %v449
        %v750 = vpop.f32.mrf.mxu0
        %v751 = vadd.f32 0.0, %v750
        %v752 = vpop.f32.mrf.mxu0
        %v753 = vadd.f32 0.0, %v752
        %754 = vmatmul.bf16.gmra.mxu0 %v453
        %v755 = vpop.f32.mrf.mxu0
        %v756 = vadd.f32 0.0, %v755
        %v757 = vpop.f32.mrf.mxu0
        %v758 = vadd.f32 0.0, %v757
        %759 = vmatmul.bf16.gmra.mxu0 %v457
        %v760 = vpop.f32.mrf.mxu0
        %v761 = vadd.f32 0.0, %v760
        %v762 = vpop.f32.mrf.mxu0
        %v763 = vadd.f32 0.0, %v762
        %764 = vmatmul.bf16.gmra.mxu0 %v461
        %v765 = vpop.f32.mrf.mxu0
        %v766 = vadd.f32 0.0, %v765
        %v767 = vpop.f32.mrf.mxu0
        %v768 = vadd.f32 0.0, %v767
        %769 = vdwg.mxu0
        %770 = vmatpush.bf16.msra.mxu0 %v672
        %771 = vmatpush.bf16.msra.mxu0 %v671
        %772 = vmatpush.bf16.msra.mxu0 %v670
        %773 = vmatpush.bf16.msra.mxu0 %v669
        %774 = vmatpush.bf16.msra.mxu0 %v668
        %775 = vmatpush.bf16.msra.mxu0 %v667
        %776 = vmatpush.bf16.msra.mxu0 %v666
        %777 = vmatpush.bf16.msra.mxu0 %v665
        %778 = vmatmul.bf16.gmra.mxu0 %v434
        %v779 = vpop.f32.mrf.mxu0
        %v780 = vadd.f32 %v731, %v779
        %v781 = vpop.f32.mrf.mxu0
        %v782 = vadd.f32 %v733, %v781
        %783 = vmatmul.bf16.gmra.mxu0 %v438
        %v784 = vpop.f32.mrf.mxu0
        %v785 = vadd.f32 %v736, %v784
        %v786 = vpop.f32.mrf.mxu0
        %v787 = vadd.f32 %v738, %v786
        %788 = vmatmul.bf16.gmra.mxu0 %v442
        %v789 = vpop.f32.mrf.mxu0
        %v790 = vadd.f32 %v741, %v789
        %v791 = vpop.f32.mrf.mxu0
        %v792 = vadd.f32 %v743, %v791
        %793 = vmatmul.bf16.gmra.mxu0 %v446
        %v794 = vpop.f32.mrf.mxu0
        %v795 = vadd.f32 %v746, %v794
        %v796 = vpop.f32.mrf.mxu0
        %v797 = vadd.f32 %v748, %v796
        %798 = vmatmul.bf16.gmra.mxu0 %v450
        %v799 = vpop.f32.mrf.mxu0
        %v800 = vadd.f32 %v751, %v799
        %v801 = vpop.f32.mrf.mxu0
        %v802 = vadd.f32 %v753, %v801
        %803 = vmatmul.bf16.gmra.mxu0 %v454
        %v804 = vpop.f32.mrf.mxu0
        %v805 = vadd.f32 %v756, %v804
        %v806 = vpop.f32.mrf.mxu0
        %v807 = vadd.f32 %v758, %v806
        %808 = vmatmul.bf16.gmra.mxu0 %v458
        %v809 = vpop.f32.mrf.mxu0
        %v810 = vadd.f32 %v761, %v809
        %v811 = vpop.f32.mrf.mxu0
        %v812 = vadd.f32 %v763, %v811
        %813 = vmatmul.bf16.gmra.mxu0 %v462
        %v814 = vpop.f32.mrf.mxu0
        %v815 = vadd.f32 %v766, %v814
        %v816 = vpop.f32.mrf.mxu0
        %v817 = vadd.f32 %v768, %v816
        %818 = vdwg.mxu0
        %819 = vmatpush.bf16.msra.mxu0 %v680
        %820 = vmatpush.bf16.msra.mxu0 %v679
        %821 = vmatpush.bf16.msra.mxu0 %v678
        %822 = vmatpush.bf16.msra.mxu0 %v677
        %823 = vmatpush.bf16.msra.mxu0 %v676
        %824 = vmatpush.bf16.msra.mxu0 %v675
        %825 = vmatpush.bf16.msra.mxu0 %v674
        %826 = vmatpush.bf16.msra.mxu0 %v673
        %827 = vmatmul.bf16.gmra.mxu0 %v435
        %v828 = vpop.f32.mrf.mxu0
        %v829 = vadd.f32 %v780, %v828
        %v830 = vpop.f32.mrf.mxu0
        %v831 = vadd.f32 %v782, %v830
        %832 = vmatmul.bf16.gmra.mxu0 %v439
        %v833 = vpop.f32.mrf.mxu0
        %v834 = vadd.f32 %v785, %v833
        %v835 = vpop.f32.mrf.mxu0
        %v836 = vadd.f32 %v787, %v835
        %837 = vmatmul.bf16.gmra.mxu0 %v443
        %v838 = vpop.f32.mrf.mxu0
        %v839 = vadd.f32 %v790, %v838
        %v840 = vpop.f32.mrf.mxu0
        %v841 = vadd.f32 %v792, %v840
        %842 = vmatmul.bf16.gmra.mxu0 %v447
        %v843 = vpop.f32.mrf.mxu0
        %v844 = vadd.f32 %v795, %v843
        %v845 = vpop.f32.mrf.mxu0
        %v846 = vadd.f32 %v797, %v845
        %847 = vmatmul.bf16.gmra.mxu0 %v451
        %v848 = vpop.f32.mrf.mxu0
        %v849 = vadd.f32 %v800, %v848
        %v850 = vpop.f32.mrf.mxu0
        %v851 = vadd.f32 %v802, %v850
        %852 = vmatmul.bf16.gmra.mxu0 %v455
        %v853 = vpop.f32.mrf.mxu0
        %v854 = vadd.f32 %v805, %v853
        %v855 = vpop.f32.mrf.mxu0
        %v856 = vadd.f32 %v807, %v855
        %857 = vmatmul.bf16.gmra.mxu0 %v459
        %v858 = vpop.f32.mrf.mxu0
        %v859 = vadd.f32 %v810, %v858
        %v860 = vpop.f32.mrf.mxu0
        %v861 = vadd.f32 %v812, %v860
        %862 = vmatmul.bf16.gmra.mxu0 %v463
        %v863 = vpop.f32.mrf.mxu0
        %v864 = vadd.f32 %v815, %v863
        %v865 = vpop.f32.mrf.mxu0
        %v866 = vadd.f32 %v817, %v865
        %867 = vdwg.mxu0
        %868 = vmatpush.bf16.msra.mxu0 %v688
        %869 = vmatpush.bf16.msra.mxu0 %v687
        %870 = vmatpush.bf16.msra.mxu0 %v686
        %871 = vmatpush.bf16.msra.mxu0 %v685
        %872 = vmatpush.bf16.msra.mxu0 %v684
        %873 = vmatpush.bf16.msra.mxu0 %v683
        %874 = vmatpush.bf16.msra.mxu0 %v682
        %875 = vmatpush.bf16.msra.mxu0 %v681
        %876 = vmatmul.bf16.gmra.mxu0 %v436
        %v877 = vpop.f32.mrf.mxu0
        %v878 = vadd.f32 %v829, %v877
        %v879 = vpop.f32.mrf.mxu0
        %v880 = vadd.f32 %v831, %v879
        %881 = vmatmul.bf16.gmra.mxu0 %v440
        %v882 = vpop.f32.mrf.mxu0
        %v883 = vadd.f32 %v834, %v882
        %v884 = vpop.f32.mrf.mxu0
        %v885 = vadd.f32 %v836, %v884
        %886 = vmatmul.bf16.gmra.mxu0 %v444
        %v887 = vpop.f32.mrf.mxu0
        %v888 = vadd.f32 %v839, %v887
        %v889 = vpop.f32.mrf.mxu0
        %v890 = vadd.f32 %v841, %v889
        %891 = vmatmul.bf16.gmra.mxu0 %v448
        %v892 = vpop.f32.mrf.mxu0
        %v893 = vadd.f32 %v844, %v892
        %v894 = vpop.f32.mrf.mxu0
        %v895 = vadd.f32 %v846, %v894
        %896 = vmatmul.bf16.gmra.mxu0 %v452
        %v897 = vpop.f32.mrf.mxu0
        %v898 = vadd.f32 %v849, %v897
        %v899 = vpop.f32.mrf.mxu0
        %v900 = vadd.f32 %v851, %v899
        %901 = vmatmul.bf16.gmra.mxu0 %v456
        %v902 = vpop.f32.mrf.mxu0
        %v903 = vadd.f32 %v854, %v902
        %v904 = vpop.f32.mrf.mxu0
        %v905 = vadd.f32 %v856, %v904
        %906 = vmatmul.bf16.gmra.mxu0 %v460
        %v907 = vpop.f32.mrf.mxu0
        %v908 = vadd.f32 %v859, %v907
        %v909 = vpop.f32.mrf.mxu0
        %v910 = vadd.f32 %v861, %v909
        %911 = vmatmul.bf16.gmra.mxu0 %v464
        %v912 = vpop.f32.mrf.mxu0
        %v913 = vadd.f32 %v864, %v912
        %v914 = vpop.f32.mrf.mxu0
        %v915 = vadd.f32 %v866, %v914
        %916 = vdwg.mxu0
        %v917 = vadd.f32 %v353, %v878
        %v918 = vadd.f32 %v354, %v880
        %v919 = vadd.f32 %v355, %v883
        %v920 = vadd.f32 %v356, %v885
        %v921 = vadd.f32 %v357, %v888
        %v922 = vadd.f32 %v358, %v890
        %v923 = vadd.f32 %v359, %v893
        %v924 = vadd.f32 %v360, %v895
        %v925 = vadd.f32 %v361, %v898
        %v926 = vadd.f32 %v362, %v900
        %v927 = vadd.f32 %v363, %v903
        %v928 = vadd.f32 %v364, %v905
        %v929 = vadd.f32 %v365, %v908
        %v930 = vadd.f32 %v366, %v910
        %v931 = vadd.f32 %v367, %v913
        %v932 = vadd.f32 %v368, %v915
        %933 = vst [vmem:[#allocation2] sm:$0xff] %v917
        %934 = vst [vmem:[#allocation2 + $0x8] sm:$0xff] %v918
        %935 = vst [vmem:[#allocation2 + $0x10] sm:$0xff] %v919
        %936 = vst [vmem:[#allocation2 + $0x18] sm:$0xff] %v920
        %937 = vst [vmem:[#allocation2 + $0x20] sm:$0xff] %v921
        %938 = vst [vmem:[#allocation2 + $0x28] sm:$0xff] %v922
        %939 = vst [vmem:[#allocation2 + $0x30] sm:$0xff] %v923
        %940 = vst [vmem:[#allocation2 + $0x38] sm:$0xff] %v924
        %941 = vst [vmem:[#allocation2 + $0x40] sm:$0xff] %v925
        %942 = vst [vmem:[#allocation2 + $0x48] sm:$0xff] %v926
        %943 = vst [vmem:[#allocation2 + $0x50] sm:$0xff] %v927
        %944 = vst [vmem:[#allocation2 + $0x58] sm:$0xff] %v928
        %945 = vst [vmem:[#allocation2 + $0x60] sm:$0xff] %v929
        %946 = vst [vmem:[#allocation2 + $0x68] sm:$0xff] %v930
        %947 = vst [vmem:[#allocation2 + $0x70] sm:$0xff] %v931
        %948 = vst [vmem:[#allocation2 + $0x78] sm:$0xff] %v932
        %p949 = scmp.eq.s32.totalorder %s29, 3
        // Predicated region
        $region57: #{layernormnet_forward.1} parent=43 // pred_check
          %p950 = pneg %p949
        $region58: #{layernormnet_forward.1} parent=43 // pred_check_branch
          %952 = sbr.rel (%p950) target = $region60
        $region59: #{layernormnet_forward.1} parent=43 // pred_region
          %v953 = vld [vmem:[%s4] sm:$0xff]
          %v954 = vld [vmem:[#allocation2] sm:$0xff]
          %v955 = vld [vmem:[#allocation2 + $0x8] sm:$0xff]
          %v956 = vld [vmem:[#allocation2 + $0x10] sm:$0xff]
          %v957 = vld [vmem:[#allocation2 + $0x18] sm:$0xff]
          %v958 = vld [vmem:[#allocation2 + $0x20] sm:$0xff]
          %v959 = vld [vmem:[#allocation2 + $0x28] sm:$0xff]
          %v960 = vld [vmem:[#allocation2 + $0x30] sm:$0xff]
          %v961 = vld [vmem:[#allocation2 + $0x38] sm:$0xff]
          %v962 = vld [vmem:[#allocation2 + $0x40] sm:$0xff]
          %v963 = vld [vmem:[#allocation2 + $0x48] sm:$0xff]
          %v964 = vld [vmem:[#allocation2 + $0x50] sm:$0xff]
          %v965 = vld [vmem:[#allocation2 + $0x58] sm:$0xff]
          %v966 = vld [vmem:[#allocation2 + $0x60] sm:$0xff]
          %v967 = vld [vmem:[#allocation2 + $0x68] sm:$0xff]
          %v968 = vld [vmem:[#allocation2 + $0x70] sm:$0xff]
          %v969 = vld [vmem:[#allocation2 + $0x78] sm:$0xff]
          %v970 = vperm.slane %v953, 0
          %v971 = vadd.f32 %v954, %v970
          %v972 = vadd.f32 %v955, %v970
          %v973 = vadd.f32 %v956, %v970
          %v974 = vadd.f32 %v957, %v970
          %v975 = vadd.f32 %v958, %v970
          %v976 = vadd.f32 %v959, %v970
          %v977 = vadd.f32 %v960, %v970
          %v978 = vadd.f32 %v961, %v970
          %v979 = vadd.f32 %v962, %v970
          %v980 = vadd.f32 %v963, %v970
          %v981 = vadd.f32 %v964, %v970
          %v982 = vadd.f32 %v965, %v970
          %v983 = vadd.f32 %v966, %v970
          %v984 = vadd.f32 %v967, %v970
          %v985 = vadd.f32 %v968, %v970
          %v986 = vadd.f32 %v969, %v970
          %987 = vadd.xlane.f32.xlu0 %v971
          %v988 = vpop.xlane.xlu0 %987
          %989 = vadd.xlane.f32.xlu0 %v972
          %v990 = vpop.xlane.xlu0 %989
          %991 = vadd.xlane.f32.xlu0 %v973
          %v992 = vpop.xlane.xlu0 %991
          %993 = vadd.xlane.f32.xlu0 %v974
          %v994 = vpop.xlane.xlu0 %993
          %995 = vadd.xlane.f32.xlu0 %v975
          %v996 = vpop.xlane.xlu0 %995
          %997 = vadd.xlane.f32.xlu0 %v976
          %v998 = vpop.xlane.xlu0 %997
          %999 = vadd.xlane.f32.xlu0 %v977
          %v1000 = vpop.xlane.xlu0 %999
          %1001 = vadd.xlane.f32.xlu0 %v978
          %v1002 = vpop.xlane.xlu0 %1001
          %1003 = vadd.xlane.f32.xlu0 %v979
          %v1004 = vpop.xlane.xlu0 %1003
          %1005 = vadd.xlane.f32.xlu0 %v980
          %v1006 = vpop.xlane.xlu0 %1005
          %1007 = vadd.xlane.f32.xlu0 %v981
          %v1008 = vpop.xlane.xlu0 %1007
          %1009 = vadd.xlane.f32.xlu0 %v982
          %v1010 = vpop.xlane.xlu0 %1009
          %1011 = vadd.xlane.f32.xlu0 %v983
          %v1012 = vpop.xlane.xlu0 %1011
          %1013 = vadd.xlane.f32.xlu0 %v984
          %v1014 = vpop.xlane.xlu0 %1013
          %1015 = vadd.xlane.f32.xlu0 %v985
          %v1016 = vpop.xlane.xlu0 %1015
          %1017 = vadd.xlane.f32.xlu0 %v986
          %v1018 = vpop.xlane.xlu0 %1017
          %v1019 = vmul.f32 %v971, %v971
          %v1020 = vmul.f32 %v972, %v972
          %v1021 = vmul.f32 %v973, %v973
          %v1022 = vmul.f32 %v974, %v974
          %v1023 = vmul.f32 %v975, %v975
          %v1024 = vmul.f32 %v976, %v976
          %v1025 = vmul.f32 %v977, %v977
          %v1026 = vmul.f32 %v978, %v978
          %v1027 = vmul.f32 %v979, %v979
          %v1028 = vmul.f32 %v980, %v980
          %v1029 = vmul.f32 %v981, %v981
          %v1030 = vmul.f32 %v982, %v982
          %v1031 = vmul.f32 %v983, %v983
          %v1032 = vmul.f32 %v984, %v984
          %v1033 = vmul.f32 %v985, %v985
          %v1034 = vmul.f32 %v986, %v986
          %1035 = vadd.xlane.f32.xlu0 %v1019
          %v1036 = vpop.xlane.xlu0 %1035
          %1037 = vadd.xlane.f32.xlu0 %v1020
          %v1038 = vpop.xlane.xlu0 %1037
          %1039 = vadd.xlane.f32.xlu0 %v1021
          %v1040 = vpop.xlane.xlu0 %1039
          %1041 = vadd.xlane.f32.xlu0 %v1022
          %v1042 = vpop.xlane.xlu0 %1041
          %1043 = vadd.xlane.f32.xlu0 %v1023
          %v1044 = vpop.xlane.xlu0 %1043
          %1045 = vadd.xlane.f32.xlu0 %v1024
          %v1046 = vpop.xlane.xlu0 %1045
          %1047 = vadd.xlane.f32.xlu0 %v1025
          %v1048 = vpop.xlane.xlu0 %1047
          %1049 = vadd.xlane.f32.xlu0 %v1026
          %v1050 = vpop.xlane.xlu0 %1049
          %1051 = vadd.xlane.f32.xlu0 %v1027
          %v1052 = vpop.xlane.xlu0 %1051
          %1053 = vadd.xlane.f32.xlu0 %v1028
          %v1054 = vpop.xlane.xlu0 %1053
          %1055 = vadd.xlane.f32.xlu0 %v1029
          %v1056 = vpop.xlane.xlu0 %1055
          %1057 = vadd.xlane.f32.xlu0 %v1030
          %v1058 = vpop.xlane.xlu0 %1057
          %1059 = vadd.xlane.f32.xlu0 %v1031
          %v1060 = vpop.xlane.xlu0 %1059
          %1061 = vadd.xlane.f32.xlu0 %v1032
          %v1062 = vpop.xlane.xlu0 %1061
          %1063 = vadd.xlane.f32.xlu0 %v1033
          %v1064 = vpop.xlane.xlu0 %1063
          %1065 = vadd.xlane.f32.xlu0 %v1034
          %v1066 = vpop.xlane.xlu0 %1065
          %v1067 = vmul.f32 %v988, 0.0078125
          %v1068 = vmul.f32 %v990, 0.0078125
          %v1069 = vmul.f32 %v992, 0.0078125
          %v1070 = vmul.f32 %v994, 0.0078125
          %v1071 = vmul.f32 %v996, 0.0078125
          %v1072 = vmul.f32 %v998, 0.0078125
          %v1073 = vmul.f32 %v1000, 0.0078125
          %v1074 = vmul.f32 %v1002, 0.0078125
          %v1075 = vmul.f32 %v1004, 0.0078125
          %v1076 = vmul.f32 %v1006, 0.0078125
          %v1077 = vmul.f32 %v1008, 0.0078125
          %v1078 = vmul.f32 %v1010, 0.0078125
          %v1079 = vmul.f32 %v1012, 0.0078125
          %v1080 = vmul.f32 %v1014, 0.0078125
          %v1081 = vmul.f32 %v1016, 0.0078125
          %v1082 = vmul.f32 %v1018, 0.0078125
          %v1083 = vmul.f32 %v1036, 0.0078125
          %v1084 = vmul.f32 %v1038, 0.0078125
          %v1085 = vmul.f32 %v1040, 0.0078125
          %v1086 = vmul.f32 %v1042, 0.0078125
          %v1087 = vmul.f32 %v1044, 0.0078125
          %v1088 = vmul.f32 %v1046, 0.0078125
          %v1089 = vmul.f32 %v1048, 0.0078125
          %v1090 = vmul.f32 %v1050, 0.0078125
          %v1091 = vmul.f32 %v1052, 0.0078125
          %v1092 = vmul.f32 %v1054, 0.0078125
          %v1093 = vmul.f32 %v1056, 0.0078125
          %v1094 = vmul.f32 %v1058, 0.0078125
          %v1095 = vmul.f32 %v1060, 0.0078125
          %v1096 = vmul.f32 %v1062, 0.0078125
          %v1097 = vmul.f32 %v1064, 0.0078125
          %v1098 = vmul.f32 %v1066, 0.0078125
          %v1099 = vmul.f32 %v1067, %v1067
          %v1100 = vmul.f32 %v1068, %v1068
          %v1101 = vmul.f32 %v1069, %v1069
          %v1102 = vmul.f32 %v1070, %v1070
          %v1103 = vmul.f32 %v1071, %v1071
          %v1104 = vmul.f32 %v1072, %v1072
          %v1105 = vmul.f32 %v1073, %v1073
          %v1106 = vmul.f32 %v1074, %v1074
          %v1107 = vmul.f32 %v1075, %v1075
          %v1108 = vmul.f32 %v1076, %v1076
          %v1109 = vmul.f32 %v1077, %v1077
          %v1110 = vmul.f32 %v1078, %v1078
          %v1111 = vmul.f32 %v1079, %v1079
          %v1112 = vmul.f32 %v1080, %v1080
          %v1113 = vmul.f32 %v1081, %v1081
          %v1114 = vmul.f32 %v1082, %v1082
          %v1115 = vsub.f32 %v1083, %v1099
          %v1116 = vsub.f32 %v1084, %v1100
          %v1117 = vsub.f32 %v1085, %v1101
          %v1118 = vsub.f32 %v1086, %v1102
          %v1119 = vsub.f32 %v1087, %v1103
          %v1120 = vsub.f32 %v1088, %v1104
          %v1121 = vsub.f32 %v1089, %v1105
          %v1122 = vsub.f32 %v1090, %v1106
          %v1123 = vsub.f32 %v1091, %v1107
          %v1124 = vsub.f32 %v1092, %v1108
          %v1125 = vsub.f32 %v1093, %v1109
          %v1126 = vsub.f32 %v1094, %v1110
          %v1127 = vsub.f32 %v1095, %v1111
          %v1128 = vsub.f32 %v1096, %v1112
          %v1129 = vsub.f32 %v1097, %v1113
          %v1130 = vsub.f32 %v1098, %v1114
          %v1131 = vsub.f32 %v971, %v1067
          %v1132 = vsub.f32 %v972, %v1068
          %v1133 = vsub.f32 %v973, %v1069
          %v1134 = vsub.f32 %v974, %v1070
          %v1135 = vsub.f32 %v975, %v1071
          %v1136 = vsub.f32 %v976, %v1072
          %v1137 = vsub.f32 %v977, %v1073
          %v1138 = vsub.f32 %v978, %v1074
          %v1139 = vsub.f32 %v979, %v1075
          %v1140 = vsub.f32 %v980, %v1076
          %v1141 = vsub.f32 %v981, %v1077
          %v1142 = vsub.f32 %v982, %v1078
          %v1143 = vsub.f32 %v983, %v1079
          %v1144 = vsub.f32 %v984, %v1080
          %v1145 = vsub.f32 %v985, %v1081
          %v1146 = vsub.f32 %v986, %v1082
          %v1147 = vadd.f32 %v1115, 1e-05
          %v1148 = vadd.f32 %v1116, 1e-05
          %v1149 = vadd.f32 %v1117, 1e-05
          %v1150 = vadd.f32 %v1118, 1e-05
          %v1151 = vadd.f32 %v1119, 1e-05
          %v1152 = vadd.f32 %v1120, 1e-05
          %v1153 = vadd.f32 %v1121, 1e-05
          %v1154 = vadd.f32 %v1122, 1e-05
          %v1155 = vadd.f32 %v1123, 1e-05
          %v1156 = vadd.f32 %v1124, 1e-05
          %v1157 = vadd.f32 %v1125, 1e-05
          %v1158 = vadd.f32 %v1126, 1e-05
          %v1159 = vadd.f32 %v1127, 1e-05
          %v1160 = vadd.f32 %v1128, 1e-05
          %v1161 = vadd.f32 %v1129, 1e-05
          %v1162 = vadd.f32 %v1130, 1e-05
          %v1163 = vrsqrt.pop %v1147
          %v1164 = vmul.f32 %v1163, %v1147
          %v1165 = vmul.f32 %v1164, %v1163
          %v1166 = vmul.f32 0.5, %v1165
          %v1167 = vsub.f32 1.5, %v1166
          %v1168 = vmul.f32 %v1163, %v1167
          %vm1169 = vweird.f32 %v1147
          %vm1170 = vweird.f32 %v1163
          %vm1171 = vmor %vm1169, %vm1170
          %v1172 = vsel %vm1171, %v1163, %v1168
          %v1173 = vrsqrt.pop %v1148
          %v1174 = vmul.f32 %v1173, %v1148
          %v1175 = vmul.f32 %v1174, %v1173
          %v1176 = vmul.f32 0.5, %v1175
          %v1177 = vsub.f32 1.5, %v1176
          %v1178 = vmul.f32 %v1173, %v1177
          %vm1179 = vweird.f32 %v1148
          %vm1180 = vweird.f32 %v1173
          %vm1181 = vmor %vm1179, %vm1180
          %v1182 = vsel %vm1181, %v1173, %v1178
          %v1183 = vrsqrt.pop %v1149
          %v1184 = vmul.f32 %v1183, %v1149
          %v1185 = vmul.f32 %v1184, %v1183
          %v1186 = vmul.f32 0.5, %v1185
          %v1187 = vsub.f32 1.5, %v1186
          %v1188 = vmul.f32 %v1183, %v1187
          %vm1189 = vweird.f32 %v1149
          %vm1190 = vweird.f32 %v1183
          %vm1191 = vmor %vm1189, %vm1190
          %v1192 = vsel %vm1191, %v1183, %v1188
          %v1193 = vrsqrt.pop %v1150
          %v1194 = vmul.f32 %v1193, %v1150
          %v1195 = vmul.f32 %v1194, %v1193
          %v1196 = vmul.f32 0.5, %v1195
          %v1197 = vsub.f32 1.5, %v1196
          %v1198 = vmul.f32 %v1193, %v1197
          %vm1199 = vweird.f32 %v1150
          %vm1200 = vweird.f32 %v1193
          %vm1201 = vmor %vm1199, %vm1200
          %v1202 = vsel %vm1201, %v1193, %v1198
          %v1203 = vrsqrt.pop %v1151
          %v1204 = vmul.f32 %v1203, %v1151
          %v1205 = vmul.f32 %v1204, %v1203
          %v1206 = vmul.f32 0.5, %v1205
          %v1207 = vsub.f32 1.5, %v1206
          %v1208 = vmul.f32 %v1203, %v1207
          %vm1209 = vweird.f32 %v1151
          %vm1210 = vweird.f32 %v1203
          %vm1211 = vmor %vm1209, %vm1210
          %v1212 = vsel %vm1211, %v1203, %v1208
          %v1213 = vrsqrt.pop %v1152
          %v1214 = vmul.f32 %v1213, %v1152
          %v1215 = vmul.f32 %v1214, %v1213
          %v1216 = vmul.f32 0.5, %v1215
          %v1217 = vsub.f32 1.5, %v1216
          %v1218 = vmul.f32 %v1213, %v1217
          %vm1219 = vweird.f32 %v1152
          %vm1220 = vweird.f32 %v1213
          %vm1221 = vmor %vm1219, %vm1220
          %v1222 = vsel %vm1221, %v1213, %v1218
          %v1223 = vrsqrt.pop %v1153
          %v1224 = vmul.f32 %v1223, %v1153
          %v1225 = vmul.f32 %v1224, %v1223
          %v1226 = vmul.f32 0.5, %v1225
          %v1227 = vsub.f32 1.5, %v1226
          %v1228 = vmul.f32 %v1223, %v1227
          %vm1229 = vweird.f32 %v1153
          %vm1230 = vweird.f32 %v1223
          %vm1231 = vmor %vm1229, %vm1230
          %v1232 = vsel %vm1231, %v1223, %v1228
          %v1233 = vrsqrt.pop %v1154
          %v1234 = vmul.f32 %v1233, %v1154
          %v1235 = vmul.f32 %v1234, %v1233
          %v1236 = vmul.f32 0.5, %v1235
          %v1237 = vsub.f32 1.5, %v1236
          %v1238 = vmul.f32 %v1233, %v1237
          %vm1239 = vweird.f32 %v1154
          %vm1240 = vweird.f32 %v1233
          %vm1241 = vmor %vm1239, %vm1240
          %v1242 = vsel %vm1241, %v1233, %v1238
          %v1243 = vrsqrt.pop %v1155
          %v1244 = vmul.f32 %v1243, %v1155
          %v1245 = vmul.f32 %v1244, %v1243
          %v1246 = vmul.f32 0.5, %v1245
          %v1247 = vsub.f32 1.5, %v1246
          %v1248 = vmul.f32 %v1243, %v1247
          %vm1249 = vweird.f32 %v1155
          %vm1250 = vweird.f32 %v1243
          %vm1251 = vmor %vm1249, %vm1250
          %v1252 = vsel %vm1251, %v1243, %v1248
          %v1253 = vrsqrt.pop %v1156
          %v1254 = vmul.f32 %v1253, %v1156
          %v1255 = vmul.f32 %v1254, %v1253
          %v1256 = vmul.f32 0.5, %v1255
          %v1257 = vsub.f32 1.5, %v1256
          %v1258 = vmul.f32 %v1253, %v1257
          %vm1259 = vweird.f32 %v1156
          %vm1260 = vweird.f32 %v1253
          %vm1261 = vmor %vm1259, %vm1260
          %v1262 = vsel %vm1261, %v1253, %v1258
          %v1263 = vrsqrt.pop %v1157
          %v1264 = vmul.f32 %v1263, %v1157
          %v1265 = vmul.f32 %v1264, %v1263
          %v1266 = vmul.f32 0.5, %v1265
          %v1267 = vsub.f32 1.5, %v1266
          %v1268 = vmul.f32 %v1263, %v1267
          %vm1269 = vweird.f32 %v1157
          %vm1270 = vweird.f32 %v1263
          %vm1271 = vmor %vm1269, %vm1270
          %v1272 = vsel %vm1271, %v1263, %v1268
          %v1273 = vrsqrt.pop %v1158
          %v1274 = vmul.f32 %v1273, %v1158
          %v1275 = vmul.f32 %v1274, %v1273
          %v1276 = vmul.f32 0.5, %v1275
          %v1277 = vsub.f32 1.5, %v1276
          %v1278 = vmul.f32 %v1273, %v1277
          %vm1279 = vweird.f32 %v1158
          %vm1280 = vweird.f32 %v1273
          %vm1281 = vmor %vm1279, %vm1280
          %v1282 = vsel %vm1281, %v1273, %v1278
          %v1283 = vrsqrt.pop %v1159
          %v1284 = vmul.f32 %v1283, %v1159
          %v1285 = vmul.f32 %v1284, %v1283
          %v1286 = vmul.f32 0.5, %v1285
          %v1287 = vsub.f32 1.5, %v1286
          %v1288 = vmul.f32 %v1283, %v1287
          %vm1289 = vweird.f32 %v1159
          %vm1290 = vweird.f32 %v1283
          %vm1291 = vmor %vm1289, %vm1290
          %v1292 = vsel %vm1291, %v1283, %v1288
          %v1293 = vrsqrt.pop %v1160
          %v1294 = vmul.f32 %v1293, %v1160
          %v1295 = vmul.f32 %v1294, %v1293
          %v1296 = vmul.f32 0.5, %v1295
          %v1297 = vsub.f32 1.5, %v1296
          %v1298 = vmul.f32 %v1293, %v1297
          %vm1299 = vweird.f32 %v1160
          %vm1300 = vweird.f32 %v1293
          %vm1301 = vmor %vm1299, %vm1300
          %v1302 = vsel %vm1301, %v1293, %v1298
          %v1303 = vrsqrt.pop %v1161
          %v1304 = vmul.f32 %v1303, %v1161
          %v1305 = vmul.f32 %v1304, %v1303
          %v1306 = vmul.f32 0.5, %v1305
          %v1307 = vsub.f32 1.5, %v1306
          %v1308 = vmul.f32 %v1303, %v1307
          %vm1309 = vweird.f32 %v1161
          %vm1310 = vweird.f32 %v1303
          %vm1311 = vmor %vm1309, %vm1310
          %v1312 = vsel %vm1311, %v1303, %v1308
          %v1313 = vrsqrt.pop %v1162
          %v1314 = vmul.f32 %v1313, %v1162
          %v1315 = vmul.f32 %v1314, %v1313
          %v1316 = vmul.f32 0.5, %v1315
          %v1317 = vsub.f32 1.5, %v1316
          %v1318 = vmul.f32 %v1313, %v1317
          %vm1319 = vweird.f32 %v1162
          %vm1320 = vweird.f32 %v1313
          %vm1321 = vmor %vm1319, %vm1320
          %v1322 = vsel %vm1321, %v1313, %v1318
          %v1323 = vmul.f32 %v1131, %v1172
          %v1324 = vmul.f32 %v1132, %v1182
          %v1325 = vmul.f32 %v1133, %v1192
          %v1326 = vmul.f32 %v1134, %v1202
          %v1327 = vmul.f32 %v1135, %v1212
          %v1328 = vmul.f32 %v1136, %v1222
          %v1329 = vmul.f32 %v1137, %v1232
          %v1330 = vmul.f32 %v1138, %v1242
          %v1331 = vmul.f32 %v1139, %v1252
          %v1332 = vmul.f32 %v1140, %v1262
          %v1333 = vmul.f32 %v1141, %v1272
          %v1334 = vmul.f32 %v1142, %v1282
          %v1335 = vmul.f32 %v1143, %v1292
          %v1336 = vmul.f32 %v1144, %v1302
          %v1337 = vmul.f32 %v1145, %v1312
          %v1338 = vmul.f32 %v1146, %v1322
          %v1339 = vperm.slane %v953, 1
          %v1340 = vmul.f32 %v1323, %v1339
          %v1341 = vmul.f32 %v1324, %v1339
          %v1342 = vmul.f32 %v1325, %v1339
          %v1343 = vmul.f32 %v1326, %v1339
          %v1344 = vmul.f32 %v1327, %v1339
          %v1345 = vmul.f32 %v1328, %v1339
          %v1346 = vmul.f32 %v1329, %v1339
          %v1347 = vmul.f32 %v1330, %v1339
          %v1348 = vmul.f32 %v1331, %v1339
          %v1349 = vmul.f32 %v1332, %v1339
          %v1350 = vmul.f32 %v1333, %v1339
          %v1351 = vmul.f32 %v1334, %v1339
          %v1352 = vmul.f32 %v1335, %v1339
          %v1353 = vmul.f32 %v1336, %v1339
          %v1354 = vmul.f32 %v1337, %v1339
          %v1355 = vmul.f32 %v1338, %v1339
          %v1356 = vperm.slane %v953, 2
          %v1357 = vadd.f32 %v1340, %v1356
          %v1358 = vadd.f32 %v1341, %v1356
          %v1359 = vadd.f32 %v1342, %v1356
          %v1360 = vadd.f32 %v1343, %v1356
          %v1361 = vadd.f32 %v1344, %v1356
          %v1362 = vadd.f32 %v1345, %v1356
          %v1363 = vadd.f32 %v1346, %v1356
          %v1364 = vadd.f32 %v1347, %v1356
          %v1365 = vadd.f32 %v1348, %v1356
          %v1366 = vadd.f32 %v1349, %v1356
          %v1367 = vadd.f32 %v1350, %v1356
          %v1368 = vadd.f32 %v1351, %v1356
          %v1369 = vadd.f32 %v1352, %v1356
          %v1370 = vadd.f32 %v1353, %v1356
          %v1371 = vadd.f32 %v1354, %v1356
          %v1372 = vadd.f32 %v1355, %v1356
          %v1373 = vmax.f32 %v1357, 0.0
          %v1374 = vmax.f32 %v1358, 0.0
          %v1375 = vmax.f32 %v1359, 0.0
          %v1376 = vmax.f32 %v1360, 0.0
          %v1377 = vmax.f32 %v1361, 0.0
          %v1378 = vmax.f32 %v1362, 0.0
          %v1379 = vmax.f32 %v1363, 0.0
          %v1380 = vmax.f32 %v1364, 0.0
          %v1381 = vmax.f32 %v1365, 0.0
          %v1382 = vmax.f32 %v1366, 0.0
          %v1383 = vmax.f32 %v1367, 0.0
          %v1384 = vmax.f32 %v1368, 0.0
          %v1385 = vmax.f32 %v1369, 0.0
          %v1386 = vmax.f32 %v1370, 0.0
          %v1387 = vmax.f32 %v1371, 0.0
          %v1388 = vmax.f32 %v1372, 0.0
          %v1389 = vpack.c.bf16 %v1374, %v1373
          %v1390 = vpack.c.bf16 %v1376, %v1375
          %v1391 = vpack.c.bf16 %v1378, %v1377
          %v1392 = vpack.c.bf16 %v1380, %v1379
          %v1393 = vpack.c.bf16 %v1382, %v1381
          %v1394 = vpack.c.bf16 %v1384, %v1383
          %v1395 = vpack.c.bf16 %v1386, %v1385
          %v1396 = vpack.c.bf16 %v1388, %v1387
          %v1397 = vld [vmem:[%s2] sm:$0xf]
          %v1398 = vld [vmem:[%s2 + $0x4] sm:$0xf]
          %v1399 = vld [vmem:[%s2 + $0x8] sm:$0xf]
          %v1400 = vld [vmem:[%s2 + $0xc] sm:$0xf]
          %v1401 = vld [vmem:[%s2 + $0x10] sm:$0xf]
          %v1402 = vld [vmem:[%s2 + $0x14] sm:$0xf]
          %v1403 = vld [vmem:[%s2 + $0x18] sm:$0xf]
          %v1404 = vld [vmem:[%s2 + $0x1c] sm:$0xf]
          %v1405 = vld [vmem:[%s2 + $0x20] sm:$0xf]
          %v1406 = vld [vmem:[%s2 + $0x24] sm:$0xf]
          %v1407 = vld [vmem:[%s2 + $0x28] sm:$0xf]
          %v1408 = vld [vmem:[%s2 + $0x2c] sm:$0xf]
          %v1409 = vld [vmem:[%s2 + $0x30] sm:$0xf]
          %v1410 = vld [vmem:[%s2 + $0x34] sm:$0xf]
          %v1411 = vld [vmem:[%s2 + $0x38] sm:$0xf]
          %v1412 = vld [vmem:[%s2 + $0x3c] sm:$0xf]
          %v1413 = vperm.slane %v953, 3
          %v1430 = vunpack.c.l.b16 %v1397
          %v1431 = vunpack.c.l.b16 %v1398
          %v1432 = vunpack.c.l.b16 %v1399
          %v1433 = vunpack.c.l.b16 %v1400
          %v1434 = vunpack.c.l.b16 %v1401
          %v1435 = vunpack.c.l.b16 %v1402
          %v1436 = vunpack.c.l.b16 %v1403
          %v1437 = vunpack.c.l.b16 %v1404
          %v1438 = vunpack.c.l.b16 %v1405
          %v1439 = vunpack.c.l.b16 %v1406
          %v1440 = vunpack.c.l.b16 %v1407
          %v1441 = vunpack.c.l.b16 %v1408
          %v1442 = vunpack.c.l.b16 %v1409
          %v1443 = vunpack.c.l.b16 %v1410
          %v1444 = vunpack.c.l.b16 %v1411
          %v1445 = vunpack.c.l.b16 %v1412
          %v1446 = vpack.c.b16 %v1431, %v1430
          %v1447 = vpack.c.b16 %v1433, %v1432
          %v1448 = vpack.c.b16 %v1435, %v1434
          %v1449 = vpack.c.b16 %v1437, %v1436
          %v1450 = vpack.c.b16 %v1439, %v1438
          %v1451 = vpack.c.b16 %v1441, %v1440
          %v1452 = vpack.c.b16 %v1443, %v1442
          %v1453 = vpack.c.b16 %v1445, %v1444
          %1462 = vmatpush.bf16.msra.mxu0 %v1453
          %1463 = vmatpush.bf16.msra.mxu0 %v1452
          %1464 = vmatpush.bf16.msra.mxu0 %v1451
          %1465 = vmatpush.bf16.msra.mxu0 %v1450
          %1466 = vmatpush.bf16.msra.mxu0 %v1449
          %1467 = vmatpush.bf16.msra.mxu0 %v1448
          %1468 = vmatpush.bf16.msra.mxu0 %v1447
          %1469 = vmatpush.bf16.msra.mxu0 %v1446
          %1470 = vmatmul.bf16.gmra.mxu0 %v1389
          %v1471 = vpop.f32.mrf.mxu0
          %v1472 = vadd.f32 %v1413, %v1471
          %v1473 = vpop.f32.mrf.mxu0
          %v1474 = vadd.f32 %v1413, %v1473
          %1475 = vmatmul.bf16.gmra.mxu0 %v1390
          %v1476 = vpop.f32.mrf.mxu0
          %v1477 = vadd.f32 %v1413, %v1476
          %v1478 = vpop.f32.mrf.mxu0
          %v1479 = vadd.f32 %v1413, %v1478
          %1480 = vmatmul.bf16.gmra.mxu0 %v1391
          %v1481 = vpop.f32.mrf.mxu0
          %v1482 = vadd.f32 %v1413, %v1481
          %v1483 = vpop.f32.mrf.mxu0
          %v1484 = vadd.f32 %v1413, %v1483
          %1485 = vmatmul.bf16.gmra.mxu0 %v1392
          %v1486 = vpop.f32.mrf.mxu0
          %v1487 = vadd.f32 %v1413, %v1486
          %v1488 = vpop.f32.mrf.mxu0
          %v1489 = vadd.f32 %v1413, %v1488
          %1490 = vmatmul.bf16.gmra.mxu0 %v1393
          %v1491 = vpop.f32.mrf.mxu0
          %v1492 = vadd.f32 %v1413, %v1491
          %v1493 = vpop.f32.mrf.mxu0
          %v1494 = vadd.f32 %v1413, %v1493
          %1495 = vmatmul.bf16.gmra.mxu0 %v1394
          %v1496 = vpop.f32.mrf.mxu0
          %v1497 = vadd.f32 %v1413, %v1496
          %v1498 = vpop.f32.mrf.mxu0
          %v1499 = vadd.f32 %v1413, %v1498
          %1500 = vmatmul.bf16.gmra.mxu0 %v1395
          %v1501 = vpop.f32.mrf.mxu0
          %v1502 = vadd.f32 %v1413, %v1501
          %v1503 = vpop.f32.mrf.mxu0
          %v1504 = vadd.f32 %v1413, %v1503
          %1505 = vmatmul.bf16.gmra.mxu0 %v1396
          %v1506 = vpop.f32.mrf.mxu0
          %v1507 = vadd.f32 %v1413, %v1506
          %v1508 = vpop.f32.mrf.mxu0
          %v1509 = vadd.f32 %v1413, %v1508
          %1510 = vdwg.mxu0
          %1511 = vadd.xlane.f32.xlu0 %v1472
          %v1512 = vpop.xlane.xlu0 %1511
          %1513 = vadd.xlane.f32.xlu0 %v1474
          %v1514 = vpop.xlane.xlu0 %1513
          %1515 = vadd.xlane.f32.xlu0 %v1477
          %v1516 = vpop.xlane.xlu0 %1515
          %1517 = vadd.xlane.f32.xlu0 %v1479
          %v1518 = vpop.xlane.xlu0 %1517
          %1519 = vadd.xlane.f32.xlu0 %v1482
          %v1520 = vpop.xlane.xlu0 %1519
          %1521 = vadd.xlane.f32.xlu0 %v1484
          %v1522 = vpop.xlane.xlu0 %1521
          %1523 = vadd.xlane.f32.xlu0 %v1487
          %v1524 = vpop.xlane.xlu0 %1523
          %1525 = vadd.xlane.f32.xlu0 %v1489
          %v1526 = vpop.xlane.xlu0 %1525
          %1527 = vadd.xlane.f32.xlu0 %v1492
          %v1528 = vpop.xlane.xlu0 %1527
          %1529 = vadd.xlane.f32.xlu0 %v1494
          %v1530 = vpop.xlane.xlu0 %1529
          %1531 = vadd.xlane.f32.xlu0 %v1497
          %v1532 = vpop.xlane.xlu0 %1531
          %1533 = vadd.xlane.f32.xlu0 %v1499
          %v1534 = vpop.xlane.xlu0 %1533
          %1535 = vadd.xlane.f32.xlu0 %v1502
          %v1536 = vpop.xlane.xlu0 %1535
          %1537 = vadd.xlane.f32.xlu0 %v1504
          %v1538 = vpop.xlane.xlu0 %1537
          %1539 = vadd.xlane.f32.xlu0 %v1507
          %v1540 = vpop.xlane.xlu0 %1539
          %1541 = vadd.xlane.f32.xlu0 %v1509
          %v1542 = vpop.xlane.xlu0 %1541
          %v1543 = vmul.f32 %v1472, %v1472
          %v1544 = vmul.f32 %v1474, %v1474
          %v1545 = vmul.f32 %v1477, %v1477
          %v1546 = vmul.f32 %v1479, %v1479
          %v1547 = vmul.f32 %v1482, %v1482
          %v1548 = vmul.f32 %v1484, %v1484
          %v1549 = vmul.f32 %v1487, %v1487
          %v1550 = vmul.f32 %v1489, %v1489
          %v1551 = vmul.f32 %v1492, %v1492
          %v1552 = vmul.f32 %v1494, %v1494
          %v1553 = vmul.f32 %v1497, %v1497
          %v1554 = vmul.f32 %v1499, %v1499
          %v1555 = vmul.f32 %v1502, %v1502
          %v1556 = vmul.f32 %v1504, %v1504
          %v1557 = vmul.f32 %v1507, %v1507
          %v1558 = vmul.f32 %v1509, %v1509
          %1559 = vadd.xlane.f32.xlu0 %v1543
          %v1560 = vpop.xlane.xlu0 %1559
          %1561 = vadd.xlane.f32.xlu0 %v1544
          %v1562 = vpop.xlane.xlu0 %1561
          %1563 = vadd.xlane.f32.xlu0 %v1545
          %v1564 = vpop.xlane.xlu0 %1563
          %1565 = vadd.xlane.f32.xlu0 %v1546
          %v1566 = vpop.xlane.xlu0 %1565
          %1567 = vadd.xlane.f32.xlu0 %v1547
          %v1568 = vpop.xlane.xlu0 %1567
          %1569 = vadd.xlane.f32.xlu0 %v1548
          %v1570 = vpop.xlane.xlu0 %1569
          %1571 = vadd.xlane.f32.xlu0 %v1549
          %v1572 = vpop.xlane.xlu0 %1571
          %1573 = vadd.xlane.f32.xlu0 %v1550
          %v1574 = vpop.xlane.xlu0 %1573
          %1575 = vadd.xlane.f32.xlu0 %v1551
          %v1576 = vpop.xlane.xlu0 %1575
          %1577 = vadd.xlane.f32.xlu0 %v1552
          %v1578 = vpop.xlane.xlu0 %1577
          %1579 = vadd.xlane.f32.xlu0 %v1553
          %v1580 = vpop.xlane.xlu0 %1579
          %1581 = vadd.xlane.f32.xlu0 %v1554
          %v1582 = vpop.xlane.xlu0 %1581
          %1583 = vadd.xlane.f32.xlu0 %v1555
          %v1584 = vpop.xlane.xlu0 %1583
          %1585 = vadd.xlane.f32.xlu0 %v1556
          %v1586 = vpop.xlane.xlu0 %1585
          %1587 = vadd.xlane.f32.xlu0 %v1557
          %v1588 = vpop.xlane.xlu0 %1587
          %1589 = vadd.xlane.f32.xlu0 %v1558
          %v1590 = vpop.xlane.xlu0 %1589
          %v1591 = vmul.f32 %v1512, 0.0078125
          %v1592 = vmul.f32 %v1514, 0.0078125
          %v1593 = vmul.f32 %v1516, 0.0078125
          %v1594 = vmul.f32 %v1518, 0.0078125
          %v1595 = vmul.f32 %v1520, 0.0078125
          %v1596 = vmul.f32 %v1522, 0.0078125
          %v1597 = vmul.f32 %v1524, 0.0078125
          %v1598 = vmul.f32 %v1526, 0.0078125
          %v1599 = vmul.f32 %v1528, 0.0078125
          %v1600 = vmul.f32 %v1530, 0.0078125
          %v1601 = vmul.f32 %v1532, 0.0078125
          %v1602 = vmul.f32 %v1534, 0.0078125
          %v1603 = vmul.f32 %v1536, 0.0078125
          %v1604 = vmul.f32 %v1538, 0.0078125
          %v1605 = vmul.f32 %v1540, 0.0078125
          %v1606 = vmul.f32 %v1542, 0.0078125
          %v1607 = vmul.f32 %v1560, 0.0078125
          %v1608 = vmul.f32 %v1562, 0.0078125
          %v1609 = vmul.f32 %v1564, 0.0078125
          %v1610 = vmul.f32 %v1566, 0.0078125
          %v1611 = vmul.f32 %v1568, 0.0078125
          %v1612 = vmul.f32 %v1570, 0.0078125
          %v1613 = vmul.f32 %v1572, 0.0078125
          %v1614 = vmul.f32 %v1574, 0.0078125
          %v1615 = vmul.f32 %v1576, 0.0078125
          %v1616 = vmul.f32 %v1578, 0.0078125
          %v1617 = vmul.f32 %v1580, 0.0078125
          %v1618 = vmul.f32 %v1582, 0.0078125
          %v1619 = vmul.f32 %v1584, 0.0078125
          %v1620 = vmul.f32 %v1586, 0.0078125
          %v1621 = vmul.f32 %v1588, 0.0078125
          %v1622 = vmul.f32 %v1590, 0.0078125
          %v1623 = vmul.f32 %v1591, %v1591
          %v1624 = vmul.f32 %v1592, %v1592
          %v1625 = vmul.f32 %v1593, %v1593
          %v1626 = vmul.f32 %v1594, %v1594
          %v1627 = vmul.f32 %v1595, %v1595
          %v1628 = vmul.f32 %v1596, %v1596
          %v1629 = vmul.f32 %v1597, %v1597
          %v1630 = vmul.f32 %v1598, %v1598
          %v1631 = vmul.f32 %v1599, %v1599
          %v1632 = vmul.f32 %v1600, %v1600
          %v1633 = vmul.f32 %v1601, %v1601
          %v1634 = vmul.f32 %v1602, %v1602
          %v1635 = vmul.f32 %v1603, %v1603
          %v1636 = vmul.f32 %v1604, %v1604
          %v1637 = vmul.f32 %v1605, %v1605
          %v1638 = vmul.f32 %v1606, %v1606
          %v1639 = vsub.f32 %v1607, %v1623
          %v1640 = vsub.f32 %v1608, %v1624
          %v1641 = vsub.f32 %v1609, %v1625
          %v1642 = vsub.f32 %v1610, %v1626
          %v1643 = vsub.f32 %v1611, %v1627
          %v1644 = vsub.f32 %v1612, %v1628
          %v1645 = vsub.f32 %v1613, %v1629
          %v1646 = vsub.f32 %v1614, %v1630
          %v1647 = vsub.f32 %v1615, %v1631
          %v1648 = vsub.f32 %v1616, %v1632
          %v1649 = vsub.f32 %v1617, %v1633
          %v1650 = vsub.f32 %v1618, %v1634
          %v1651 = vsub.f32 %v1619, %v1635
          %v1652 = vsub.f32 %v1620, %v1636
          %v1653 = vsub.f32 %v1621, %v1637
          %v1654 = vsub.f32 %v1622, %v1638
          %v1655 = vsub.f32 %v1472, %v1591
          %v1656 = vsub.f32 %v1474, %v1592
          %v1657 = vsub.f32 %v1477, %v1593
          %v1658 = vsub.f32 %v1479, %v1594
          %v1659 = vsub.f32 %v1482, %v1595
          %v1660 = vsub.f32 %v1484, %v1596
          %v1661 = vsub.f32 %v1487, %v1597
          %v1662 = vsub.f32 %v1489, %v1598
          %v1663 = vsub.f32 %v1492, %v1599
          %v1664 = vsub.f32 %v1494, %v1600
          %v1665 = vsub.f32 %v1497, %v1601
          %v1666 = vsub.f32 %v1499, %v1602
          %v1667 = vsub.f32 %v1502, %v1603
          %v1668 = vsub.f32 %v1504, %v1604
          %v1669 = vsub.f32 %v1507, %v1605
          %v1670 = vsub.f32 %v1509, %v1606
          %v1671 = vadd.f32 %v1639, 1e-05
          %v1672 = vadd.f32 %v1640, 1e-05
          %v1673 = vadd.f32 %v1641, 1e-05
          %v1674 = vadd.f32 %v1642, 1e-05
          %v1675 = vadd.f32 %v1643, 1e-05
          %v1676 = vadd.f32 %v1644, 1e-05
          %v1677 = vadd.f32 %v1645, 1e-05
          %v1678 = vadd.f32 %v1646, 1e-05
          %v1679 = vadd.f32 %v1647, 1e-05
          %v1680 = vadd.f32 %v1648, 1e-05
          %v1681 = vadd.f32 %v1649, 1e-05
          %v1682 = vadd.f32 %v1650, 1e-05
          %v1683 = vadd.f32 %v1651, 1e-05
          %v1684 = vadd.f32 %v1652, 1e-05
          %v1685 = vadd.f32 %v1653, 1e-05
          %v1686 = vadd.f32 %v1654, 1e-05
          %v1687 = vrsqrt.pop %v1671
          %v1688 = vmul.f32 %v1687, %v1671
          %v1689 = vmul.f32 %v1688, %v1687
          %v1690 = vmul.f32 0.5, %v1689
          %v1691 = vsub.f32 1.5, %v1690
          %v1692 = vmul.f32 %v1687, %v1691
          %vm1693 = vweird.f32 %v1671
          %vm1694 = vweird.f32 %v1687
          %vm1695 = vmor %vm1693, %vm1694
          %v1696 = vsel %vm1695, %v1687, %v1692
          %v1697 = vrsqrt.pop %v1672
          %v1698 = vmul.f32 %v1697, %v1672
          %v1699 = vmul.f32 %v1698, %v1697
          %v1700 = vmul.f32 0.5, %v1699
          %v1701 = vsub.f32 1.5, %v1700
          %v1702 = vmul.f32 %v1697, %v1701
          %vm1703 = vweird.f32 %v1672
          %vm1704 = vweird.f32 %v1697
          %vm1705 = vmor %vm1703, %vm1704
          %v1706 = vsel %vm1705, %v1697, %v1702
          %v1707 = vrsqrt.pop %v1673
          %v1708 = vmul.f32 %v1707, %v1673
          %v1709 = vmul.f32 %v1708, %v1707
          %v1710 = vmul.f32 0.5, %v1709
          %v1711 = vsub.f32 1.5, %v1710
          %v1712 = vmul.f32 %v1707, %v1711
          %vm1713 = vweird.f32 %v1673
          %vm1714 = vweird.f32 %v1707
          %vm1715 = vmor %vm1713, %vm1714
          %v1716 = vsel %vm1715, %v1707, %v1712
          %v1717 = vrsqrt.pop %v1674
          %v1718 = vmul.f32 %v1717, %v1674
          %v1719 = vmul.f32 %v1718, %v1717
          %v1720 = vmul.f32 0.5, %v1719
          %v1721 = vsub.f32 1.5, %v1720
          %v1722 = vmul.f32 %v1717, %v1721
          %vm1723 = vweird.f32 %v1674
          %vm1724 = vweird.f32 %v1717
          %vm1725 = vmor %vm1723, %vm1724
          %v1726 = vsel %vm1725, %v1717, %v1722
          %v1727 = vrsqrt.pop %v1675
          %v1728 = vmul.f32 %v1727, %v1675
          %v1729 = vmul.f32 %v1728, %v1727
          %v1730 = vmul.f32 0.5, %v1729
          %v1731 = vsub.f32 1.5, %v1730
          %v1732 = vmul.f32 %v1727, %v1731
          %vm1733 = vweird.f32 %v1675
          %vm1734 = vweird.f32 %v1727
          %vm1735 = vmor %vm1733, %vm1734
          %v1736 = vsel %vm1735, %v1727, %v1732
          %v1737 = vrsqrt.pop %v1676
          %v1738 = vmul.f32 %v1737, %v1676
          %v1739 = vmul.f32 %v1738, %v1737
          %v1740 = vmul.f32 0.5, %v1739
          %v1741 = vsub.f32 1.5, %v1740
          %v1742 = vmul.f32 %v1737, %v1741
          %vm1743 = vweird.f32 %v1676
          %vm1744 = vweird.f32 %v1737
          %vm1745 = vmor %vm1743, %vm1744
          %v1746 = vsel %vm1745, %v1737, %v1742
          %v1747 = vrsqrt.pop %v1677
          %v1748 = vmul.f32 %v1747, %v1677
          %v1749 = vmul.f32 %v1748, %v1747
          %v1750 = vmul.f32 0.5, %v1749
          %v1751 = vsub.f32 1.5, %v1750
          %v1752 = vmul.f32 %v1747, %v1751
          %vm1753 = vweird.f32 %v1677
          %vm1754 = vweird.f32 %v1747
          %vm1755 = vmor %vm1753, %vm1754
          %v1756 = vsel %vm1755, %v1747, %v1752
          %v1757 = vrsqrt.pop %v1678
          %v1758 = vmul.f32 %v1757, %v1678
          %v1759 = vmul.f32 %v1758, %v1757
          %v1760 = vmul.f32 0.5, %v1759
          %v1761 = vsub.f32 1.5, %v1760
          %v1762 = vmul.f32 %v1757, %v1761
          %vm1763 = vweird.f32 %v1678
          %vm1764 = vweird.f32 %v1757
          %vm1765 = vmor %vm1763, %vm1764
          %v1766 = vsel %vm1765, %v1757, %v1762
          %v1767 = vrsqrt.pop %v1679
          %v1768 = vmul.f32 %v1767, %v1679
          %v1769 = vmul.f32 %v1768, %v1767
          %v1770 = vmul.f32 0.5, %v1769
          %v1771 = vsub.f32 1.5, %v1770
          %v1772 = vmul.f32 %v1767, %v1771
          %vm1773 = vweird.f32 %v1679
          %vm1774 = vweird.f32 %v1767
          %vm1775 = vmor %vm1773, %vm1774
          %v1776 = vsel %vm1775, %v1767, %v1772
          %v1777 = vrsqrt.pop %v1680
          %v1778 = vmul.f32 %v1777, %v1680
          %v1779 = vmul.f32 %v1778, %v1777
          %v1780 = vmul.f32 0.5, %v1779
          %v1781 = vsub.f32 1.5, %v1780
          %v1782 = vmul.f32 %v1777, %v1781
          %vm1783 = vweird.f32 %v1680
          %vm1784 = vweird.f32 %v1777
          %vm1785 = vmor %vm1783, %vm1784
          %v1786 = vsel %vm1785, %v1777, %v1782
          %v1787 = vrsqrt.pop %v1681
          %v1788 = vmul.f32 %v1787, %v1681
          %v1789 = vmul.f32 %v1788, %v1787
          %v1790 = vmul.f32 0.5, %v1789
          %v1791 = vsub.f32 1.5, %v1790
          %v1792 = vmul.f32 %v1787, %v1791
          %vm1793 = vweird.f32 %v1681
          %vm1794 = vweird.f32 %v1787
          %vm1795 = vmor %vm1793, %vm1794
          %v1796 = vsel %vm1795, %v1787, %v1792
          %v1797 = vrsqrt.pop %v1682
          %v1798 = vmul.f32 %v1797, %v1682
          %v1799 = vmul.f32 %v1798, %v1797
          %v1800 = vmul.f32 0.5, %v1799
          %v1801 = vsub.f32 1.5, %v1800
          %v1802 = vmul.f32 %v1797, %v1801
          %vm1803 = vweird.f32 %v1682
          %vm1804 = vweird.f32 %v1797
          %vm1805 = vmor %vm1803, %vm1804
          %v1806 = vsel %vm1805, %v1797, %v1802
          %v1807 = vrsqrt.pop %v1683
          %v1808 = vmul.f32 %v1807, %v1683
          %v1809 = vmul.f32 %v1808, %v1807
          %v1810 = vmul.f32 0.5, %v1809
          %v1811 = vsub.f32 1.5, %v1810
          %v1812 = vmul.f32 %v1807, %v1811
          %vm1813 = vweird.f32 %v1683
          %vm1814 = vweird.f32 %v1807
          %vm1815 = vmor %vm1813, %vm1814
          %v1816 = vsel %vm1815, %v1807, %v1812
          %v1817 = vrsqrt.pop %v1684
          %v1818 = vmul.f32 %v1817, %v1684
          %v1819 = vmul.f32 %v1818, %v1817
          %v1820 = vmul.f32 0.5, %v1819
          %v1821 = vsub.f32 1.5, %v1820
          %v1822 = vmul.f32 %v1817, %v1821
          %vm1823 = vweird.f32 %v1684
          %vm1824 = vweird.f32 %v1817
          %vm1825 = vmor %vm1823, %vm1824
          %v1826 = vsel %vm1825, %v1817, %v1822
          %v1827 = vrsqrt.pop %v1685
          %v1828 = vmul.f32 %v1827, %v1685
          %v1829 = vmul.f32 %v1828, %v1827
          %v1830 = vmul.f32 0.5, %v1829
          %v1831 = vsub.f32 1.5, %v1830
          %v1832 = vmul.f32 %v1827, %v1831
          %vm1833 = vweird.f32 %v1685
          %vm1834 = vweird.f32 %v1827
          %vm1835 = vmor %vm1833, %vm1834
          %v1836 = vsel %vm1835, %v1827, %v1832
          %v1837 = vrsqrt.pop %v1686
          %v1838 = vmul.f32 %v1837, %v1686
          %v1839 = vmul.f32 %v1838, %v1837
          %v1840 = vmul.f32 0.5, %v1839
          %v1841 = vsub.f32 1.5, %v1840
          %v1842 = vmul.f32 %v1837, %v1841
          %vm1843 = vweird.f32 %v1686
          %vm1844 = vweird.f32 %v1837
          %vm1845 = vmor %vm1843, %vm1844
          %v1846 = vsel %vm1845, %v1837, %v1842
          %v1847 = vmul.f32 %v1655, %v1696
          %v1848 = vmul.f32 %v1656, %v1706
          %v1849 = vmul.f32 %v1657, %v1716
          %v1850 = vmul.f32 %v1658, %v1726
          %v1851 = vmul.f32 %v1659, %v1736
          %v1852 = vmul.f32 %v1660, %v1746
          %v1853 = vmul.f32 %v1661, %v1756
          %v1854 = vmul.f32 %v1662, %v1766
          %v1855 = vmul.f32 %v1663, %v1776
          %v1856 = vmul.f32 %v1664, %v1786
          %v1857 = vmul.f32 %v1665, %v1796
          %v1858 = vmul.f32 %v1666, %v1806
          %v1859 = vmul.f32 %v1667, %v1816
          %v1860 = vmul.f32 %v1668, %v1826
          %v1861 = vmul.f32 %v1669, %v1836
          %v1862 = vmul.f32 %v1670, %v1846
          %v1863 = vperm.slane %v953, 4
          %v1864 = vmul.f32 %v1847, %v1863
          %v1865 = vmul.f32 %v1848, %v1863
          %v1866 = vmul.f32 %v1849, %v1863
          %v1867 = vmul.f32 %v1850, %v1863
          %v1868 = vmul.f32 %v1851, %v1863
          %v1869 = vmul.f32 %v1852, %v1863
          %v1870 = vmul.f32 %v1853, %v1863
          %v1871 = vmul.f32 %v1854, %v1863
          %v1872 = vmul.f32 %v1855, %v1863
          %v1873 = vmul.f32 %v1856, %v1863
          %v1874 = vmul.f32 %v1857, %v1863
          %v1875 = vmul.f32 %v1858, %v1863
          %v1876 = vmul.f32 %v1859, %v1863
          %v1877 = vmul.f32 %v1860, %v1863
          %v1878 = vmul.f32 %v1861, %v1863
          %v1879 = vmul.f32 %v1862, %v1863
          %v1880 = vperm.slane %v953, 5
          %v1881 = vadd.f32 %v1864, %v1880
          %v1882 = vadd.f32 %v1865, %v1880
          %v1883 = vadd.f32 %v1866, %v1880
          %v1884 = vadd.f32 %v1867, %v1880
          %v1885 = vadd.f32 %v1868, %v1880
          %v1886 = vadd.f32 %v1869, %v1880
          %v1887 = vadd.f32 %v1870, %v1880
          %v1888 = vadd.f32 %v1871, %v1880
          %v1889 = vadd.f32 %v1872, %v1880
          %v1890 = vadd.f32 %v1873, %v1880
          %v1891 = vadd.f32 %v1874, %v1880
          %v1892 = vadd.f32 %v1875, %v1880
          %v1893 = vadd.f32 %v1876, %v1880
          %v1894 = vadd.f32 %v1877, %v1880
          %v1895 = vadd.f32 %v1878, %v1880
          %v1896 = vadd.f32 %v1879, %v1880
          %v1897 = vmax.f32 %v1881, 0.0
          %v1898 = vmax.f32 %v1882, 0.0
          %v1899 = vmax.f32 %v1883, 0.0
          %v1900 = vmax.f32 %v1884, 0.0
          %v1901 = vmax.f32 %v1885, 0.0
          %v1902 = vmax.f32 %v1886, 0.0
          %v1903 = vmax.f32 %v1887, 0.0
          %v1904 = vmax.f32 %v1888, 0.0
          %v1905 = vmax.f32 %v1889, 0.0
          %v1906 = vmax.f32 %v1890, 0.0
          %v1907 = vmax.f32 %v1891, 0.0
          %v1908 = vmax.f32 %v1892, 0.0
          %v1909 = vmax.f32 %v1893, 0.0
          %v1910 = vmax.f32 %v1894, 0.0
          %v1911 = vmax.f32 %v1895, 0.0
          %v1912 = vmax.f32 %v1896, 0.0
          %v1913 = vpack.c.bf16 %v1898, %v1897
          %v1914 = vpack.c.bf16 %v1900, %v1899
          %v1915 = vpack.c.bf16 %v1902, %v1901
          %v1916 = vpack.c.bf16 %v1904, %v1903
          %v1917 = vpack.c.bf16 %v1906, %v1905
          %v1918 = vpack.c.bf16 %v1908, %v1907
          %v1919 = vpack.c.bf16 %v1910, %v1909
          %v1920 = vpack.c.bf16 %v1912, %v1911
          %v1921 = vld [vmem:[%s3] sm:$0xf]
          %v1922 = vld [vmem:[%s3 + $0x4] sm:$0xf]
          %v1923 = vld [vmem:[%s3 + $0x8] sm:$0xf]
          %v1924 = vld [vmem:[%s3 + $0xc] sm:$0xf]
          %v1925 = vld [vmem:[%s3 + $0x10] sm:$0xf]
          %v1926 = vld [vmem:[%s3 + $0x14] sm:$0xf]
          %v1927 = vld [vmem:[%s3 + $0x18] sm:$0xf]
          %v1928 = vld [vmem:[%s3 + $0x1c] sm:$0xf]
          %v1929 = vld [vmem:[%s3 + $0x20] sm:$0xf]
          %v1930 = vld [vmem:[%s3 + $0x24] sm:$0xf]
          %v1931 = vld [vmem:[%s3 + $0x28] sm:$0xf]
          %v1932 = vld [vmem:[%s3 + $0x2c] sm:$0xf]
          %v1933 = vld [vmem:[%s3 + $0x30] sm:$0xf]
          %v1934 = vld [vmem:[%s3 + $0x34] sm:$0xf]
          %v1935 = vld [vmem:[%s3 + $0x38] sm:$0xf]
          %v1936 = vld [vmem:[%s3 + $0x3c] sm:$0xf]
          %v1937 = vld [vmem:[#allocation6] sm:$0x1]
          %v1939 = vperm.slane %v1937, 0
          %v1957 = vunpack.c.l.b16 %v1921
          %v1958 = vunpack.c.l.b16 %v1922
          %v1959 = vunpack.c.l.b16 %v1923
          %v1960 = vunpack.c.l.b16 %v1924
          %v1961 = vunpack.c.l.b16 %v1925
          %v1962 = vunpack.c.l.b16 %v1926
          %v1963 = vunpack.c.l.b16 %v1927
          %v1964 = vunpack.c.l.b16 %v1928
          %v1965 = vunpack.c.l.b16 %v1929
          %v1966 = vunpack.c.l.b16 %v1930
          %v1967 = vunpack.c.l.b16 %v1931
          %v1968 = vunpack.c.l.b16 %v1932
          %v1969 = vunpack.c.l.b16 %v1933
          %v1970 = vunpack.c.l.b16 %v1934
          %v1971 = vunpack.c.l.b16 %v1935
          %v1972 = vunpack.c.l.b16 %v1936
          %v1973 = vpack.c.b16 %v1958, %v1957
          %v1974 = vpack.c.b16 %v1960, %v1959
          %v1975 = vpack.c.b16 %v1962, %v1961
          %v1976 = vpack.c.b16 %v1964, %v1963
          %v1977 = vpack.c.b16 %v1966, %v1965
          %v1978 = vpack.c.b16 %v1968, %v1967
          %v1979 = vpack.c.b16 %v1970, %v1969
          %v1980 = vpack.c.b16 %v1972, %v1971
          %1989 = vmatpush.bf16.msra.mxu0 %v1980
          %1990 = vmatpush.bf16.msra.mxu0 %v1979
          %1991 = vmatpush.bf16.msra.mxu0 %v1978
          %1992 = vmatpush.bf16.msra.mxu0 %v1977
          %1993 = vmatpush.bf16.msra.mxu0 %v1976
          %1994 = vmatpush.bf16.msra.mxu0 %v1975
          %1995 = vmatpush.bf16.msra.mxu0 %v1974
          %1996 = vmatpush.bf16.msra.mxu0 %v1973
          %1997 = vmatmul.bf16.gmra.mxu0 %v1913
          %v1998 = vpop.f32.mrf.mxu0
          %v1999 = vadd.f32 %v1939, %v1998
          %v2000 = vpop.f32.mrf.mxu0
          %v2001 = vadd.f32 %v1939, %v2000
          %2002 = vmatmul.bf16.gmra.mxu0 %v1914
          %v2003 = vpop.f32.mrf.mxu0
          %v2004 = vadd.f32 %v1939, %v2003
          %v2005 = vpop.f32.mrf.mxu0
          %v2006 = vadd.f32 %v1939, %v2005
          %2007 = vmatmul.bf16.gmra.mxu0 %v1915
          %v2008 = vpop.f32.mrf.mxu0
          %v2009 = vadd.f32 %v1939, %v2008
          %v2010 = vpop.f32.mrf.mxu0
          %v2011 = vadd.f32 %v1939, %v2010
          %2012 = vmatmul.bf16.gmra.mxu0 %v1916
          %v2013 = vpop.f32.mrf.mxu0
          %v2014 = vadd.f32 %v1939, %v2013
          %v2015 = vpop.f32.mrf.mxu0
          %v2016 = vadd.f32 %v1939, %v2015
          %2017 = vmatmul.bf16.gmra.mxu0 %v1917
          %v2018 = vpop.f32.mrf.mxu0
          %v2019 = vadd.f32 %v1939, %v2018
          %v2020 = vpop.f32.mrf.mxu0
          %v2021 = vadd.f32 %v1939, %v2020
          %2022 = vmatmul.bf16.gmra.mxu0 %v1918
          %v2023 = vpop.f32.mrf.mxu0
          %v2024 = vadd.f32 %v1939, %v2023
          %v2025 = vpop.f32.mrf.mxu0
          %v2026 = vadd.f32 %v1939, %v2025
          %2027 = vmatmul.bf16.gmra.mxu0 %v1919
          %v2028 = vpop.f32.mrf.mxu0
          %v2029 = vadd.f32 %v1939, %v2028
          %v2030 = vpop.f32.mrf.mxu0
          %v2031 = vadd.f32 %v1939, %v2030
          %2032 = vmatmul.bf16.gmra.mxu0 %v1920
          %v2033 = vpop.f32.mrf.mxu0
          %v2034 = vadd.f32 %v1939, %v2033
          %v2035 = vpop.f32.mrf.mxu0
          %v2036 = vadd.f32 %v1939, %v2035
          %2037 = vdwg.mxu0
          %2038 = vst [vmem:[%s322] sm:$0xff] %v1999
          %2039 = vst [vmem:[%s322 + $0x8] sm:$0xff] %v2001
          %2040 = vst [vmem:[%s322 + $0x10] sm:$0xff] %v2004
          %2041 = vst [vmem:[%s322 + $0x18] sm:$0xff] %v2006
          %2042 = vst [vmem:[%s322 + $0x20] sm:$0xff] %v2009
          %2043 = vst [vmem:[%s322 + $0x28] sm:$0xff] %v2011
          %2044 = vst [vmem:[%s322 + $0x30] sm:$0xff] %v2014
          %2045 = vst [vmem:[%s322 + $0x38] sm:$0xff] %v2016
          %2046 = vst [vmem:[%s322 + $0x40] sm:$0xff] %v2019
          %2047 = vst [vmem:[%s322 + $0x48] sm:$0xff] %v2021
          %2048 = vst [vmem:[%s322 + $0x50] sm:$0xff] %v2024
          %2049 = vst [vmem:[%s322 + $0x58] sm:$0xff] %v2026
          %2050 = vst [vmem:[%s322 + $0x60] sm:$0xff] %v2029
          %2051 = vst [vmem:[%s322 + $0x68] sm:$0xff] %v2031
          %2052 = vst [vmem:[%s322 + $0x70] sm:$0xff] %v2034
          %2053 = vst [vmem:[%s322 + $0x78] sm:$0xff] %v2036
        $region60: #{layernormnet_forward.1} parent=43 // pred_fallthru
          _
        %s2054 = sand.u32 %s184, 1
        %s2055 = scalar_lea.sflag [#allocation5], %s2054
        %s2056 = sand.u32 %s184, 1
        %s2057 = smul.addr %s2056, 128
        %s2058 = scalar_lea.vmem [#allocation8], %s2057
        // Predicated region
        $region61: #{layernormnet_forward.1} parent=43 // pred_check
          %p2059 = pneg %p194
        $region62: #{layernormnet_forward.1} parent=43 // pred_check_branch
          %2061 = sbr.rel (%p2059) target = $region64
        $region63: #{layernormnet_forward.1} parent=43 // pred_region
          %s2062 = smul.u32 16, %s28
          %2064 = vsyncadd %s2055, 0
          %s2065 = smul.addr %s2062, 8
          %s2066 = scalar_lea.hbm %s6, %s2065
          %s2067 = sshll.u32 %s2058, 4
          %s2068 = int_to_ptr.vmem [resolvable:$true] %s2067
          %s2069 = sshll.u32 %s2066, 4
          %s2070 = int_to_ptr.hbm [resolvable:$true] %s2069
          %2075 = dma.vmem_to_hbm [thread:$0]  %s2068, 2048, %s2070, %s2055, 128, 128, 8
        $region64: #{layernormnet_forward.1} parent=43 // pred_fallthru
          _
      $region44: #{layernormnet_forward.1} parent=5 // pred_fallthru
        _
      %p2076 = scmp.le.s32.totalorder 2, %s19
      // Predicated region
      $region65: #{layernormnet_forward.1} parent=5 // pred_check
        %p2077 = pneg %p2076
      $region66: #{layernormnet_forward.1} parent=5 // pred_check_branch
        %2079 = sbr.rel (%p2077) target = $region68
      $region67: #{layernormnet_forward.1} parent=5 // pred_region
        %s2080 = ssub.s32 %s19, 2
        // Predicated region
        $region69: #{layernormnet_forward.1} parent=67 // pred_check
          %p2081 = pneg %p200
        $region70: #{layernormnet_forward.1} parent=67 // pred_check_branch
          %2083 = sbr.rel (%p2081) target = $region72
        $region71: #{layernormnet_forward.1} parent=67 // pred_region
          %s2084 = sand.u32 %s185, 1
          %s2085 = scalar_lea.sflag [#allocation5], %s2084
          %s2086 = sand.u32 %s185, 1
          %s2087 = smul.addr %s2086, 128
          %s2088 = scalar_lea.vmem [#allocation8], %s2087
          %2090 = dma.done %s2085, 2048
        $region72: #{layernormnet_forward.1} parent=67 // pred_fallthru
          _
      $region68: #{layernormnet_forward.1} parent=5 // pred_fallthru
        _
    $region6: #{layernormnet_forward.1} parent=1 // loop_footer
      %s23 = sadd.s32 1, %s19
    $region7: #{layernormnet_forward.1} parent=1 // loop_footer_branch
      %18 = sbr.rel target = $region3
    $region8: #{layernormnet_forward.1} parent=1 // loop_exit
      _
    %2091 = vsyncpa [#allocation4], 1
    %s2092 = scalar_lea.sflag [#allocation4], 1
    %2093 = vsyncpa %s2092, 1
    %2094 = vsyncpa [#allocation7], 1
    %2095 = vsyncpa [#allocation5], 1
    %s2096 = scalar_lea.sflag [#allocation5], 1
    %2097 = vsyncpa %s2096, 1

</llo_original>
